<compile_context>
chip_gen: v6e
topology: v6e:2x2x1
jax: 0.10.0
libtpu: 0.0.40
codegen_flags: <defaults>
</compile_context>

<pallas_src>
import functools
import math

import jax
import jax.numpy as jnp
from jax.experimental import pallas as pl
from jax.experimental.pallas import tpu as pltpu

# ----------------------------- model dimensions -----------------------------
# (scaled down from ImageBind-LLM: 1024->4096, 4096*4 FFN, 32 layers, 32 heads)
IB_DIM = 128          # imagebind feature dim (stands in for 1024)
DIM = 128             # llama model dim        (stands in for 4096)
ADAPTER_HIDDEN = 4 * DIM
VOCAB = 256
N_LAYERS = 4
N_HEADS = 4
HEAD_DIM = DIM // N_HEADS
FFN_DIM = 2 * DIM
QUERY_LAYER = 2       # stands in for 32 (== n_layers in the real model)
QUERY_LEN = 1
MAX_SEQ = 16
NORM_EPS = 1e-5

# NOTE on scaling to real LLaMA-7B dims (not exercised at these toy shapes):
#   - tile tn=tk=256 (tm 256-512) on v6e/v7x, tn=tk=128 on v5e,
#   - cap tm and set pltpu.CompilerParams(vmem_limit_bytes=...) for v7x's
#     64 MiB VMEM, and add a K-tiled accumulator loop (K no longer fits one
#     block).  At the shapes used here every K fits a single VMEM block, so
#     the kernels below intentionally skip the K reduction loop.


# ============================== Pallas kernels ==============================
def _rms_matmul_kernel(x_ref, g_ref, w_ref, o_ref):
    """o = rmsnorm(x; g) @ w   (norm in f32, matmul in bf16, f32 accumulate)."""
    x = x_ref[...].astype(jnp.float32)
    ms = jnp.mean(x * x, axis=-1, keepdims=True)
    xn = (x * jax.lax.rsqrt(ms + NORM_EPS) * g_ref[...]).astype(jnp.bfloat16)
    o_ref[...] = jnp.dot(xn, w_ref[...],
                         preferred_element_type=jnp.float32).astype(o_ref.dtype)


def _ln_matmul_bias_kernel(x_ref, g_ref, bn_ref, w_ref, b_ref, o_ref):
    """o = layernorm(x; g, bn) @ w + b."""
    x = x_ref[...].astype(jnp.float32)
    mean = jnp.mean(x, axis=-1, keepdims=True)
    var = jnp.mean(jnp.square(x - mean), axis=-1, keepdims=True)
    xn = ((x - mean) * jax.lax.rsqrt(var + NORM_EPS) * g_ref[...]
          + bn_ref[...]).astype(jnp.bfloat16)
    o_ref[...] = (jnp.dot(xn, w_ref[...], preferred_element_type=jnp.float32)
                  + b_ref[...]).astype(o_ref.dtype)


def _matmul_kernel(x_ref, w_ref, o_ref):
    """o = x @ w (no bias)."""
    o_ref[...] = jnp.dot(x_ref[...].astype(jnp.bfloat16), w_ref[...],
                         preferred_element_type=jnp.float32).astype(o_ref.dtype)


def _matmul_bias_kernel(x_ref, w_ref, b_ref, o_ref):
    """o = x @ w + b."""
    o_ref[...] = (jnp.dot(x_ref[...].astype(jnp.bfloat16), w_ref[...],
                          preferred_element_type=jnp.float32)
                  + b_ref[...]).astype(o_ref.dtype)


def _swiglu_matmul_kernel(gu_ref, w_ref, o_ref):
    """o = (silu(gu[:, :F]) * gu[:, F:]) @ w   (fused SwiGLU down-projection)."""
    F = gu_ref.shape[-1] // 2
    g = gu_ref[:, :F].astype(jnp.float32)
    u = gu_ref[:, F:].astype(jnp.float32)
    h = (g * jax.nn.sigmoid(g) * u).astype(jnp.bfloat16)
    o_ref[...] = jnp.dot(h, w_ref[...],
                         preferred_element_type=jnp.float32).astype(o_ref.dtype)


def _swiglu_matmul_bias_kernel(gu_ref, w_ref, b_ref, o_ref):
    F = gu_ref.shape[-1] // 2
    g = gu_ref[:, :F].astype(jnp.float32)
    u = gu_ref[:, F:].astype(jnp.float32)
    h = (g * jax.nn.sigmoid(g) * u).astype(jnp.bfloat16)
    o_ref[...] = (jnp.dot(h, w_ref[...], preferred_element_type=jnp.float32)
                  + b_ref[...]).astype(o_ref.dtype)


def _attn_kernel(q_ref, k_ref, v_ref, o_ref, *, scale, n_heads, head_dim,
                 start_pos):
    """One batch element, all heads folded into the 128-lane axis.

    q/k/v blocks are (1, S, H*hd); causal mask is generated in-kernel
    (matching torch.triu(full(-inf), diagonal=start_pos+1) on the (S,S) slice).
    """
    S = q_ref.shape[1]
    q = q_ref[0]                                    # (S, D) bf16
    k = k_ref[0]
    v = v_ref[0]
    row = jax.lax.broadcasted_iota(jnp.int32, (S, S), 0)
    col = jax.lax.broadcasted_iota(jnp.int32, (S, S), 1)
    mask = jnp.where(col <= row + start_pos, 0.0, -1e30).astype(jnp.float32)

    outs = []
    for h in range(n_heads):                        # static unroll (small H)
        sl = slice(h * head_dim, (h + 1) * head_dim)
        qh, kh, vh = q[:, sl], k[:, sl], v[:, sl]
        s = jax.lax.dot_general(qh, kh, (((1,), (1,)), ((), ())),
                                preferred_element_type=jnp.float32)
        s = s * scale + mask
        s = s - jnp.max(s, axis=-1, keepdims=True)
        e = jnp.exp(s)
        p = e * pl.reciprocal(jnp.sum(e, axis=-1, keepdims=True), approx=True)
        outs.append(jnp.dot(p.astype(jnp.bfloat16), vh,
                            preferred_element_type=jnp.float32))
    o_ref[0] = jnp.concatenate(outs, axis=-1).astype(o_ref.dtype)


# ============================== kernel wrappers =============================
def _grid1(n_tiles):
    return pltpu.CompilerParams(dimension_semantics=("parallel",))


def fused_rms_matmul(x, gamma, w):
    """rmsnorm(x) @ w.  x: (..., K) f32, gamma: (K,) f32, w: (K, N) bf16."""
    orig = x.shape
    K = orig[-1]
    M = math.prod(orig[:-1])
    N = w.shape[1]
    tn = min(N, 128)
    assert N % tn == 0 and w.shape[0] == K
    out = pl.pallas_call(
        _rms_matmul_kernel,
        out_shape=jax.ShapeDtypeStruct((M, N), jnp.float32),
        grid_spec=pltpu.PrefetchScalarGridSpec(
            num_scalar_prefetch=0, grid=(N // tn,),
            in_specs=[pl.BlockSpec((M, K), lambda j: (0, 0)),
                      pl.BlockSpec((1, K), lambda j: (0, 0)),
                      pl.BlockSpec((K, tn), lambda j: (0, j))],
            out_specs=pl.BlockSpec((M, tn), lambda j: (0, j))),
        compiler_params=_grid1(N // tn),
    )(x.reshape(M, K), gamma.reshape(1, K).astype(jnp.float32), w)
    return out.reshape(orig[:-1] + (N,))


def fused_ln_matmul(x, gamma, beta, w, b):
    """layernorm(x) @ w + b.  w bf16, gamma/beta/b f32."""
    orig = x.shape
    K = orig[-1]
    M = math.prod(orig[:-1])
    N = w.shape[1]
    tn = min(N, 128)
    assert N % tn == 0 and w.shape[0] == K
    out = pl.pallas_call(
        _ln_matmul_bias_kernel,
        out_shape=jax.ShapeDtypeStruct((M, N), jnp.float32),
        grid_spec=pltpu.PrefetchScalarGridSpec(
            num_scalar_prefetch=0, grid=(N // tn,),
            in_specs=[pl.BlockSpec((M, K), lambda j: (0, 0)),
                      pl.BlockSpec((1, K), lambda j: (0, 0)),
                      pl.BlockSpec((1, K), lambda j: (0, 0)),
                      pl.BlockSpec((K, tn), lambda j: (0, j)),
                      pl.BlockSpec((1, tn), lambda j: (0, j))],
            out_specs=pl.BlockSpec((M, tn), lambda j: (0, j))),
        compiler_params=_grid1(N // tn),
    )(x.reshape(M, K), gamma.reshape(1, K).astype(jnp.float32),
      beta.reshape(1, K).astype(jnp.float32), w,
      b.reshape(1, N).astype(jnp.float32))
    return out.reshape(orig[:-1] + (N,))


def linear(x, w, b=None):
    """x @ w (+ b).  Bias-free variant avoids DMA'ing a zero vector."""
    orig = x.shape
    K = orig[-1]
    M = math.prod(orig[:-1])
    N = w.shape[1]
    tn = min(N, 128)
    assert N % tn == 0 and w.shape[0] == K
    in_specs = [pl.BlockSpec((M, K), lambda j: (0, 0)),
                pl.BlockSpec((K, tn), lambda j: (0, j))]
    args = [x.reshape(M, K), w]
    kernel = _matmul_kernel
    if b is not None:
        in_specs.append(pl.BlockSpec((1, tn), lambda j: (0, j)))
        args.append(b.reshape(1, N).astype(jnp.float32))
        kernel = _matmul_bias_kernel
    out = pl.pallas_call(
        kernel,
        out_shape=jax.ShapeDtypeStruct((M, N), jnp.float32),
        grid_spec=pltpu.PrefetchScalarGridSpec(
            num_scalar_prefetch=0, grid=(N // tn,),
            in_specs=in_specs,
            out_specs=pl.BlockSpec((M, tn), lambda j: (0, j))),
        compiler_params=_grid1(N // tn),
    )(*args)
    return out.reshape(orig[:-1] + (N,))


def swiglu_matmul(gu, w2, b=None):
    """(silu(gu[..., :F]) * gu[..., F:]) @ w2 (+ b)  with gu: (..., 2F)."""
    orig = gu.shape
    K2 = orig[-1]
    F = K2 // 2
    M = math.prod(orig[:-1])
    N = w2.shape[1]
    tn = min(N, 128)
    assert N % tn == 0 and w2.shape[0] == F
    in_specs = [pl.BlockSpec((M, K2), lambda j: (0, 0)),
                pl.BlockSpec((F, tn), lambda j: (0, j))]
    args = [gu.reshape(M, K2), w2]
    kernel = _swiglu_matmul_kernel
    if b is not None:
        in_specs.append(pl.BlockSpec((1, tn), lambda j: (0, j)))
        args.append(b.reshape(1, N).astype(jnp.float32))
        kernel = _swiglu_matmul_bias_kernel
    out = pl.pallas_call(
        kernel,
        out_shape=jax.ShapeDtypeStruct((M, N), jnp.float32),
        grid_spec=pltpu.PrefetchScalarGridSpec(
            num_scalar_prefetch=0, grid=(N // tn,),
            in_specs=in_specs,
            out_specs=pl.BlockSpec((M, tn), lambda j: (0, j))),
        compiler_params=_grid1(N // tn),
    )(*args)
    return out.reshape(orig[:-1] + (N,))


def attention(q, k, v, start_pos: int):
    """q, k, v: (B, S, D) with heads folded head-major into D -> (B, S, D)."""
    B, S, D = q.shape
    kern = functools.partial(_attn_kernel, scale=1.0 / math.sqrt(HEAD_DIM),
                             n_heads=N_HEADS, head_dim=HEAD_DIM,
                             start_pos=start_pos)
    out = pl.pallas_call(
        kern,
        out_shape=jax.ShapeDtypeStruct((B, S, D), jnp.float32),
        grid_spec=pltpu.PrefetchScalarGridSpec(
            num_scalar_prefetch=0, grid=(B,),
            in_specs=[pl.BlockSpec((1, S, D), lambda b: (b, 0, 0)),
                      pl.BlockSpec((1, S, D), lambda b: (b, 0, 0)),
                      pl.BlockSpec((1, S, D), lambda b: (b, 0, 0))],
            out_specs=pl.BlockSpec((1, S, D), lambda b: (b, 0, 0))),
        compiler_params=pltpu.CompilerParams(
            dimension_semantics=("parallel",)),
    )(q.astype(jnp.bfloat16), k.astype(jnp.bfloat16), v.astype(jnp.bfloat16))
    return out


# ================================ model glue ================================
def apply_rope(x, cos, sin):
    """x: (B, S, H, hd); cos/sin: (S, hd) pre-expanded to the interleaved
    layout (c0,c0,c1,c1,...).  Equivalent to LLaMA's complex freqs_cis
    multiply; purely elementwise + pair swap (no stride-2 gathers)."""
    B, S, H, hd = x.shape
    xp = x.reshape(B, S, H, hd // 2, 2)
    x_rot = jnp.stack([-xp[..., 1], xp[..., 0]], axis=-1).reshape(B, S, H, hd)
    return x * cos[None, :, None, :] + x_rot * sin[None, :, None, :]


def transformer_block(h, lp, cos, sin, start_pos, adapter=None):
    # TODO(synk): the llama.Transformer source is external to the reference
    # snippet; this follows the standard LLaMA-Adapter/ImageBind-LLM block
    # (pre-RMSNorm attention + SwiGLU FFN, zero-init gated adapter attention).
    # No KV cache is kept (start_pos>0 incremental decoding not modeled).
    B, S, D = h.shape

    # fused rmsnorm + QKV projection (one matmul, wqkv = wq|wk|wv).
    qkv = fused_rms_matmul(h, lp["attn_norm"], lp["wqkv"])        # (B, S, 3D)
    q, k, v = jnp.split(qkv, 3, axis=-1)
    q = apply_rope(q.reshape(B, S, N_HEADS, HEAD_DIM), cos, sin).reshape(B, S, D)
    k = apply_rope(k.reshape(B, S, N_HEADS, HEAD_DIM), cos, sin).reshape(B, S, D)

    out = attention(q, k, v, start_pos)                           # (B, S, D)

    if adapter is not None:
        # query_len == 1 => softmax over the adapter axis is identically 1,
        # so the gated adapter attention reduces to tanh(gate) * adapter_v.
        wv = lp["wqkv"][:, 2 * D:]                                # (D, D) bf16
        av = linear(adapter, wv).reshape(B, D)                    # (B, D)
        gate = jnp.repeat(jnp.tanh(lp["gate"]).astype(jnp.float32), HEAD_DIM)
        out = out + (av * gate[None, :])[:, None, :]

    h = h + linear(out, lp["wo"])

    # fused rmsnorm + (w1|w3) projection, then fused SiLU-gate + w2.
    gu = fused_rms_matmul(h, lp["ffn_norm"], lp["w13"])           # (B, S, 2F)
    h = h + swiglu_matmul(gu, lp["w2"])
    return h


def forward_visual(params, visual_feats):
    # TODO(synk): the ImageBind backbone and the faiss KNN retrieval branch
    # (knn=True) have no Pallas equivalent; `visual_feats` stands in for the
    # ImageBind output embedding and knn=False is assumed.
    v = linear(visual_feats, params["proj_w"], params["proj_b"])
    for blk in params["vis_blocks"]:
        gu = fused_ln_matmul(v, blk["norm_g"], blk["norm_b"],
                             blk["w13"], blk["b13"])              # (B, 2*AH)
        v = v + swiglu_matmul(gu, blk["f2_w"], blk["f2_b"])
    return v


def forward(params, visual_feats, tokens, start_pos: int):
    B, S = tokens.shape
    h = params["tok_emb"][tokens]                                 # (B, S, D)
    cos = params["rope_cos"][start_pos:start_pos + S]
    sin = params["rope_sin"][start_pos:start_pos + S]

    layers = params["layers"]
    for lp in layers[:-QUERY_LAYER]:
        h = transformer_block(h, lp, cos, sin, start_pos)

    prefix = params["prefix_query"].reshape(QUERY_LAYER, QUERY_LEN, DIM)
    visual_proj = visual_feats[:, None, :]                        # (B, 1, D)
    for idx, lp in enumerate(layers[-QUERY_LAYER:]):
        adapter = visual_proj + prefix[idx][None]                 # (B, 1, D)
        h = transformer_block(h, lp, cos, sin, start_pos, adapter=adapter)

    # final RMSNorm + output head fused, applied only to the last position
    # (RMSNorm is row-wise, so norming just the last row is equivalent).
    logits = fused_rms_matmul(h[:, -1, :], params["final_norm"],
                              params["output_w"])                 # (B, VOCAB)
    return logits.astype(jnp.float32)


# ============================== parameter init ==============================
def init_params(key):
    keys = iter(jax.random.split(key, 256))

    def w(shape, std=0.02, dtype=jnp.bfloat16):
        return (jax.random.normal(next(keys), shape, jnp.float32) * std).astype(dtype)

    p = {}
    p["proj_w"] = w((IB_DIM, DIM))
    p["proj_b"] = w((DIM,), dtype=jnp.float32)
    p["vis_blocks"] = [dict(norm_g=jnp.ones((DIM,), jnp.float32),
                            norm_b=jnp.zeros((DIM,), jnp.float32),
                            w13=w((DIM, 2 * ADAPTER_HIDDEN)),      # f1 | f3 fused
                            b13=w((2 * ADAPTER_HIDDEN,), dtype=jnp.float32),
                            f2_w=w((ADAPTER_HIDDEN, DIM)),
                            f2_b=w((DIM,), dtype=jnp.float32))
                       for _ in range(3)]

    p["tok_emb"] = w((VOCAB, DIM), dtype=jnp.float32)
    p["layers"] = [dict(attn_norm=jnp.ones((DIM,), jnp.float32),
                        ffn_norm=jnp.ones((DIM,), jnp.float32),
                        wqkv=w((DIM, 3 * DIM)),                    # wq|wk|wv fused
                        wo=w((DIM, DIM)),
                        w13=w((DIM, 2 * FFN_DIM)),                 # w1|w3 fused
                        w2=w((FFN_DIM, DIM)),
                        gate=w((N_HEADS,), 0.1, dtype=jnp.float32))
                   for _ in range(N_LAYERS)]
    p["prefix_query"] = w((QUERY_LAYER * QUERY_LEN, DIM), dtype=jnp.float32)
    p["final_norm"] = jnp.ones((DIM,), jnp.float32)
    p["output_w"] = w((DIM, VOCAB))

    freqs = 1.0 / (10000.0 ** (jnp.arange(0, HEAD_DIM, 2, dtype=jnp.float32)
                               / HEAD_DIM))
    ang = jnp.outer(jnp.arange(MAX_SEQ, dtype=jnp.float32), freqs)
    # interleaved-expanded (c0,c0,c1,c1,...) so apply_rope is elementwise.
    p["rope_cos"] = jnp.repeat(jnp.cos(ang), 2, axis=-1)
    p["rope_sin"] = jnp.repeat(jnp.sin(ang), 2, axis=-1)
    return p


# ==================================== main ==================================
if __name__ == "__main__":
    key = jax.random.PRNGKey(0)
    k_params, k_feats, k_tok = jax.random.split(key, 3)

    params = init_params(k_params)

    B, S = 2, 8
    # synthetic stand-in for ImageBind(imgs)[input_type] features
    ib_feats = jax.random.normal(k_feats, (B, IB_DIM), jnp.float32)
    tokens = jax.random.randint(k_tok, (B, S), 0, VOCAB)

    forward_visual_jit = jax.jit(forward_visual)
    forward_jit = jax.jit(forward, static_argnames=("start_pos",))

    visual_query = forward_visual_jit(params, ib_feats)              # (B, DIM)
    logits = forward_jit(params, visual_query, tokens, start_pos=0)  # (B, VOCAB)

    jax.block_until_ready(logits)
    assert logits.shape == (B, VOCAB) and logits.dtype == jnp.float32
    assert bool(jnp.all(jnp.isfinite(logits)))
    print("KERNEL_OK")
</pallas_src>

<mosaic_0001>
module attributes {stable_mosaic.version = 11 : i64} {
  func.func @_swiglu_matmul_bias_kernel(%arg0: i32, %arg1: memref<2x1024xf32, #tpu.memory_space<vmem>>, %arg2: memref<512x128xbf16, #tpu.memory_space<vmem>>, %arg3: memref<1x128xf32, #tpu.memory_space<vmem>>, %arg4: memref<2x128xf32, #tpu.memory_space<vmem>>) attributes {dimension_semantics = [#tpu.dimension_semantics<parallel>], iteration_bounds = array<i64: 1>, scalar_prefetch = 0 : i64, scratch_operands = 0 : i64, tpu.core_type = #tpu.core_type<tc>, window_params = [{pipeline_mode = #tpu.pipeline_mode<synchronous>, transform_indices = @transform_0, window_bounds = array<i64: 2, 1024>}, {transform_indices = @transform_1, window_bounds = array<i64: 512, 128>}, {transform_indices = @transform_2, window_bounds = array<i64: 1, 128>}, {transform_indices = @transform_3, window_bounds = array<i64: 2, 128>}]} {
    %c0 = arith.constant 0 : index
    %c0_0 = arith.constant 0 : index
    %0 = vector.load %arg1[%c0, %c0_0] : memref<2x1024xf32, #tpu.memory_space<vmem>>, vector<2x512xf32>
    %c0_1 = arith.constant 0 : index
    %c512 = arith.constant 512 : index
    %1 = vector.load %arg1[%c0_1, %c512] : memref<2x1024xf32, #tpu.memory_space<vmem>>, vector<2x512xf32>
    %2 = arith.negf %0 : vector<2x512xf32>
    %3 = math.exp %2 : vector<2x512xf32>
    %cst = arith.constant 1.000000e+00 : f32
    %4 = vector.broadcast %cst : f32 to vector<2x512xf32>
    %5 = arith.addf %4, %3 : vector<2x512xf32>
    %6 = arith.divf %4, %5 : vector<2x512xf32>
    %7 = arith.mulf %0, %6 : vector<2x512xf32>
    %8 = arith.mulf %7, %1 : vector<2x512xf32>
    %9 = arith.truncf %8 : vector<2x512xf32> to vector<2x512xbf16>
    %c0_2 = arith.constant 0 : index
    %c0_3 = arith.constant 0 : index
    %10 = vector.load %arg2[%c0_2, %c0_3] : memref<512x128xbf16, #tpu.memory_space<vmem>>, vector<512x128xbf16>
    %cst_4 = arith.constant dense<0.000000e+00> : vector<2x128xf32>
    %11 = tpu.matmul %9, %10, %cst_4 {dimension_numbers = #tpu.dot_dimension_numbers<[1], [0], [0], [1], [0, 0, 1, 1], [], []>} : vector<2x512xbf16>, vector<512x128xbf16>, vector<2x128xf32> -> vector<2x128xf32>
    %c0_5 = arith.constant 0 : index
    %c0_6 = arith.constant 0 : index
    %12 = vector.load %arg3[%c0_5, %c0_6] : memref<1x128xf32, #tpu.memory_space<vmem>>, vector<1x128xf32>
    %13 = vector.broadcast %12 : vector<1x128xf32> to vector<2x128xf32>
    %14 = arith.addf %11, %13 : vector<2x128xf32>
    %c0_7 = arith.constant 0 : index
    %c0_8 = arith.constant 0 : index
    %15 = vector.load %arg4[%c0_7, %c0_8] : memref<2x128xf32, #tpu.memory_space<vmem>>, vector<2x128xf32>
    tpu.vector_store %arg4[%c0_7, %c0_8], %14 {strides = array<i32>} : memref<2x128xf32, #tpu.memory_space<vmem>>, vector<2x128xf32>,
    return
  }
  func.func @transform_0(%arg0: i32) -> (i32, i32) {
    %c0_i32 = arith.constant 0 : i32
    %c0_i32_0 = arith.constant 0 : i32
    %c0_i32_1 = arith.constant 0 : i32
    return %c0_i32, %c0_i32_0 : i32, i32
  }
  func.func @transform_1(%arg0: i32) -> (i32, i32) {
    %c0_i32 = arith.constant 0 : i32
    %c0_i32_0 = arith.constant 0 : i32
    return %c0_i32, %arg0 : i32, i32
  }
  func.func @transform_2(%arg0: i32) -> (i32, i32) {
    %c0_i32 = arith.constant 0 : i32
    %c0_i32_0 = arith.constant 0 : i32
    return %c0_i32, %arg0 : i32, i32
  }
  func.func @transform_3(%arg0: i32) -> (i32, i32) {
    %c0_i32 = arith.constant 0 : i32
    %c0_i32_0 = arith.constant 0 : i32
    return %c0_i32, %arg0 : i32, i32
  }
}

module attributes {stable_mosaic.version = 11 : i64} {
  func.func @_matmul_bias_kernel(%arg0: i32, %arg1: memref<2x128xf32, #tpu.memory_space<vmem>>, %arg2: memref<128x128xbf16, #tpu.memory_space<vmem>>, %arg3: memref<1x128xf32, #tpu.memory_space<vmem>>, %arg4: memref<2x128xf32, #tpu.memory_space<vmem>>) attributes {dimension_semantics = [#tpu.dimension_semantics<parallel>], iteration_bounds = array<i64: 1>, scalar_prefetch = 0 : i64, scratch_operands = 0 : i64, tpu.core_type = #tpu.core_type<tc>, window_params = [{pipeline_mode = #tpu.pipeline_mode<synchronous>, transform_indices = @transform_0, window_bounds = array<i64: 2, 128>}, {transform_indices = @transform_1, window_bounds = array<i64: 128, 128>}, {transform_indices = @transform_2, window_bounds = array<i64: 1, 128>}, {transform_indices = @transform_3, window_bounds = array<i64: 2, 128>}]} {
    %c0 = arith.constant 0 : index
    %c0_0 = arith.constant 0 : index
    %0 = vector.load %arg1[%c0, %c0_0] : memref<2x128xf32, #tpu.memory_space<vmem>>, vector<2x128xf32>
    %1 = arith.truncf %0 : vector<2x128xf32> to vector<2x128xbf16>
    %c0_1 = arith.constant 0 : index
    %c0_2 = arith.constant 0 : index
    %2 = vector.load %arg2[%c0_1, %c0_2] : memref<128x128xbf16, #tpu.memory_space<vmem>>, vector<128x128xbf16>
    %cst = arith.constant dense<0.000000e+00> : vector<2x128xf32>
    %3 = tpu.matmul %1, %2, %cst {dimension_numbers = #tpu.dot_dimension_numbers<[1], [0], [0], [1], [0, 0, 1, 1], [], []>} : vector<2x128xbf16>, vector<128x128xbf16>, vector<2x128xf32> -> vector<2x128xf32>
    %c0_3 = arith.constant 0 : index
    %c0_4 = arith.constant 0 : index
    %4 = vector.load %arg3[%c0_3, %c0_4] : memref<1x128xf32, #tpu.memory_space<vmem>>, vector<1x128xf32>
    %5 = vector.broadcast %4 : vector<1x128xf32> to vector<2x128xf32>
    %6 = arith.addf %3, %5 : vector<2x128xf32>
    %c0_5 = arith.constant 0 : index
    %c0_6 = arith.constant 0 : index
    %7 = vector.load %arg4[%c0_5, %c0_6] : memref<2x128xf32, #tpu.memory_space<vmem>>, vector<2x128xf32>
    tpu.vector_store %arg4[%c0_5, %c0_6], %6 {strides = array<i32>} : memref<2x128xf32, #tpu.memory_space<vmem>>, vector<2x128xf32>,
    return
  }
  func.func @transform_0(%arg0: i32) -> (i32, i32) {
    %c0_i32 = arith.constant 0 : i32
    %c0_i32_0 = arith.constant 0 : i32
    %c0_i32_1 = arith.constant 0 : i32
    return %c0_i32, %c0_i32_0 : i32, i32
  }
  func.func @transform_1(%arg0: i32) -> (i32, i32) {
    %c0_i32 = arith.constant 0 : i32
    %c0_i32_0 = arith.constant 0 : i32
    return %c0_i32, %arg0 : i32, i32
  }
  func.func @transform_2(%arg0: i32) -> (i32, i32) {
    %c0_i32 = arith.constant 0 : i32
    %c0_i32_0 = arith.constant 0 : i32
    return %c0_i32, %arg0 : i32, i32
  }
  func.func @transform_3(%arg0: i32) -> (i32, i32) {
    %c0_i32 = arith.constant 0 : i32
    %c0_i32_0 = arith.constant 0 : i32
    return %c0_i32, %arg0 : i32, i32
  }
}

module attributes {stable_mosaic.version = 11 : i64} {
  func.func @_ln_matmul_bias_kernel(%arg0: i32, %arg1: memref<2x128xf32, #tpu.memory_space<vmem>>, %arg2: memref<1x128xf32, #tpu.memory_space<vmem>>, %arg3: memref<1x128xf32, #tpu.memory_space<vmem>>, %arg4: memref<128x128xbf16, #tpu.memory_space<vmem>>, %arg5: memref<1x128xf32, #tpu.memory_space<vmem>>, %arg6: memref<2x128xf32, #tpu.memory_space<vmem>>) attributes {dimension_semantics = [#tpu.dimension_semantics<parallel>], iteration_bounds = array<i64: 8>, scalar_prefetch = 0 : i64, scratch_operands = 0 : i64, tpu.core_type = #tpu.core_type<tc>, window_params = [{pipeline_mode = #tpu.pipeline_mode<synchronous>, transform_indices = @transform_0, window_bounds = array<i64: 2, 128>}, {pipeline_mode = #tpu.pipeline_mode<synchronous>, transform_indices = @transform_1, window_bounds = array<i64: 1, 128>}, {pipeline_mode = #tpu.pipeline_mode<synchronous>, transform_indices = @transform_2, window_bounds = array<i64: 1, 128>}, {transform_indices = @transform_3, window_bounds = array<i64: 128, 128>}, {transform_indices = @transform_4, window_bounds = array<i64: 1, 128>}, {transform_indices = @transform_5, window_bounds = array<i64: 2, 128>}]} {
    %c0 = arith.constant 0 : index
    %c0_0 = arith.constant 0 : index
    %0 = vector.load %arg1[%c0, %c0_0] : memref<2x128xf32, #tpu.memory_space<vmem>>, vector<2x128xf32>
    %cst = arith.constant dense<0.000000e+00> : vector<2xf32>
    %1 = vector.multi_reduction <add>, %0, %cst [1] : vector<2x128xf32> to vector<2xf32>
    %2 = vector.shape_cast %1 : vector<2xf32> to vector<2x1xf32>
    %cst_1 = arith.constant 1.280000e+02 : f32
    %3 = vector.broadcast %cst_1 : f32 to vector<2x1xf32>
    %4 = arith.divf %2, %3 : vector<2x1xf32>
    %5 = vector.broadcast %4 : vector<2x1xf32> to vector<2x128xf32>
    %6 = arith.subf %0, %5 : vector<2x128xf32>
    %7 = arith.mulf %6, %6 : vector<2x128xf32>
    %cst_2 = arith.constant dense<0.000000e+00> : vector<2xf32>
    %8 = vector.multi_reduction <add>, %7, %cst_2 [1] : vector<2x128xf32> to vector<2xf32>
    %9 = vector.shape_cast %8 : vector<2xf32> to vector<2x1xf32>
    %cst_3 = arith.constant 1.280000e+02 : f32
    %10 = vector.broadcast %cst_3 : f32 to vector<2x1xf32>
    %11 = arith.divf %9, %10 : vector<2x1xf32>
    %12 = vector.broadcast %4 : vector<2x1xf32> to vector<2x128xf32>
    %13 = arith.subf %0, %12 : vector<2x128xf32>
    %cst_4 = arith.constant 9.99999974E-6 : f32
    %14 = vector.broadcast %cst_4 : f32 to vector<2x1xf32>
    %15 = arith.addf %11, %14 : vector<2x1xf32>
    %16 = math.rsqrt %15 : vector<2x1xf32>
    %17 = vector.broadcast %16 : vector<2x1xf32> to vector<2x128xf32>
    %18 = arith.mulf %13, %17 : vector<2x128xf32>
    %c0_5 = arith.constant 0 : index
    %c0_6 = arith.constant 0 : index
    %19 = vector.load %arg2[%c0_5, %c0_6] : memref<1x128xf32, #tpu.memory_space<vmem>>, vector<1x128xf32>
    %20 = vector.broadcast %19 : vector<1x128xf32> to vector<2x128xf32>
    %21 = arith.mulf %18, %20 : vector<2x128xf32>
    %c0_7 = arith.constant 0 : index
    %c0_8 = arith.constant 0 : index
    %22 = vector.load %arg3[%c0_7, %c0_8] : memref<1x128xf32, #tpu.memory_space<vmem>>, vector<1x128xf32>
    %23 = vector.broadcast %22 : vector<1x128xf32> to vector<2x128xf32>
    %24 = arith.addf %21, %23 : vector<2x128xf32>
    %25 = arith.truncf %24 : vector<2x128xf32> to vector<2x128xbf16>
    %c0_9 = arith.constant 0 : index
    %c0_10 = arith.constant 0 : index
    %26 = vector.load %arg4[%c0_9, %c0_10] : memref<128x128xbf16, #tpu.memory_space<vmem>>, vector<128x128xbf16>
    %cst_11 = arith.constant dense<0.000000e+00> : vector<2x128xf32>
    %27 = tpu.matmul %25, %26, %cst_11 {dimension_numbers = #tpu.dot_dimension_numbers<[1], [0], [0], [1], [0, 0, 1, 1], [], []>} : vector<2x128xbf16>, vector<128x128xbf16>, vector<2x128xf32> -> vector<2x128xf32>
    %c0_12 = arith.constant 0 : index
    %c0_13 = arith.constant 0 : index
    %28 = vector.load %arg5[%c0_12, %c0_13] : memref<1x128xf32, #tpu.memory_space<vmem>>, vector<1x128xf32>
    %29 = vector.broadcast %28 : vector<1x128xf32> to vector<2x128xf32>
    %30 = arith.addf %27, %29 : vector<2x128xf32>
    %c0_14 = arith.constant 0 : index
    %c0_15 = arith.constant 0 : index
    %31 = vector.load %arg6[%c0_14, %c0_15] : memref<2x128xf32, #tpu.memory_space<vmem>>, vector<2x128xf32>
    tpu.vector_store %arg6[%c0_14, %c0_15], %30 {strides = array<i32>} : memref<2x128xf32, #tpu.memory_space<vmem>>, vector<2x128xf32>,
    return
  }
  func.func @transform_0(%arg0: i32) -> (i32, i32) {
    %c0_i32 = arith.constant 0 : i32
    %c0_i32_0 = arith.constant 0 : i32
    %c0_i32_1 = arith.constant 0 : i32
    return %c0_i32, %c0_i32_0 : i32, i32
  }
  func.func @transform_1(%arg0: i32) -> (i32, i32) {
    %c0_i32 = arith.constant 0 : i32
    %c0_i32_0 = arith.constant 0 : i32
    %c0_i32_1 = arith.constant 0 : i32
    return %c0_i32, %c0_i32_0 : i32, i32
  }
  func.func @transform_2(%arg0: i32) -> (i32, i32) {
    %c0_i32 = arith.constant 0 : i32
    %c0_i32_0 = arith.constant 0 : i32
    %c0_i32_1 = arith.constant 0 : i32
    return %c0_i32, %c0_i32_0 : i32, i32
  }
  func.func @transform_3(%arg0: i32) -> (i32, i32) {
    %c0_i32 = arith.constant 0 : i32
    %c0_i32_0 = arith.constant 0 : i32
    return %c0_i32, %arg0 : i32, i32
  }
  func.func @transform_4(%arg0: i32) -> (i32, i32) {
    %c0_i32 = arith.constant 0 : i32
    %c0_i32_0 = arith.constant 0 : i32
    return %c0_i32, %arg0 : i32, i32
  }
  func.func @transform_5(%arg0: i32) -> (i32, i32) {
    %c0_i32 = arith.constant 0 : i32
    %c0_i32_0 = arith.constant 0 : i32
    return %c0_i32, %arg0 : i32, i32
  }
}

module attributes {stable_mosaic.version = 11 : i64} {
  func.func @_ln_matmul_bias_kernel(%arg0: i32, %arg1: memref<2x128xf32, #tpu.memory_space<vmem>>, %arg2: memref<1x128xf32, #tpu.memory_space<vmem>>, %arg3: memref<1x128xf32, #tpu.memory_space<vmem>>, %arg4: memref<128x128xbf16, #tpu.memory_space<vmem>>, %arg5: memref<1x128xf32, #tpu.memory_space<vmem>>, %arg6: memref<2x128xf32, #tpu.memory_space<vmem>>) attributes {dimension_semantics = [#tpu.dimension_semantics<parallel>], iteration_bounds = array<i64: 8>, scalar_prefetch = 0 : i64, scratch_operands = 0 : i64, tpu.core_type = #tpu.core_type<tc>, window_params = [{pipeline_mode = #tpu.pipeline_mode<synchronous>, transform_indices = @transform_0, window_bounds = array<i64: 2, 128>}, {pipeline_mode = #tpu.pipeline_mode<synchronous>, transform_indices = @transform_1, window_bounds = array<i64: 1, 128>}, {pipeline_mode = #tpu.pipeline_mode<synchronous>, transform_indices = @transform_2, window_bounds = array<i64: 1, 128>}, {transform_indices = @transform_3, window_bounds = array<i64: 128, 128>}, {transform_indices = @transform_4, window_bounds = array<i64: 1, 128>}, {transform_indices = @transform_5, window_bounds = array<i64: 2, 128>}]} {
    %c0 = arith.constant 0 : index
    %c0_0 = arith.constant 0 : index
    %0 = vector.load %arg1[%c0, %c0_0] : memref<2x128xf32, #tpu.memory_space<vmem>>, vector<2x128xf32>
    %cst = arith.constant dense<0.000000e+00> : vector<2xf32>
    %1 = vector.multi_reduction <add>, %0, %cst [1] : vector<2x128xf32> to vector<2xf32>
    %2 = vector.shape_cast %1 : vector<2xf32> to vector<2x1xf32>
    %cst_1 = arith.constant 1.280000e+02 : f32
    %3 = vector.broadcast %cst_1 : f32 to vector<2x1xf32>
    %4 = arith.divf %2, %3 : vector<2x1xf32>
    %5 = vector.broadcast %4 : vector<2x1xf32> to vector<2x128xf32>
    %6 = arith.subf %0, %5 : vector<2x128xf32>
    %7 = arith.mulf %6, %6 : vector<2x128xf32>
    %cst_2 = arith.constant dense<0.000000e+00> : vector<2xf32>
    %8 = vector.multi_reduction <add>, %7, %cst_2 [1] : vector<2x128xf32> to vector<2xf32>
    %9 = vector.shape_cast %8 : vector<2xf32> to vector<2x1xf32>
    %cst_3 = arith.constant 1.280000e+02 : f32
    %10 = vector.broadcast %cst_3 : f32 to vector<2x1xf32>
    %11 = arith.divf %9, %10 : vector<2x1xf32>
    %12 = vector.broadcast %4 : vector<2x1xf32> to vector<2x128xf32>
    %13 = arith.subf %0, %12 : vector<2x128xf32>
    %cst_4 = arith.constant 9.99999974E-6 : f32
    %14 = vector.broadcast %cst_4 : f32 to vector<2x1xf32>
    %15 = arith.addf %11, %14 : vector<2x1xf32>
    %16 = math.rsqrt %15 : vector<2x1xf32>
    %17 = vector.broadcast %16 : vector<2x1xf32> to vector<2x128xf32>
    %18 = arith.mulf %13, %17 : vector<2x128xf32>
    %c0_5 = arith.constant 0 : index
    %c0_6 = arith.constant 0 : index
    %19 = vector.load %arg2[%c0_5, %c0_6] : memref<1x128xf32, #tpu.memory_space<vmem>>, vector<1x128xf32>
    %20 = vector.broadcast %19 : vector<1x128xf32> to vector<2x128xf32>
    %21 = arith.mulf %18, %20 : vector<2x128xf32>
    %c0_7 = arith.constant 0 : index
    %c0_8 = arith.constant 0 : index
    %22 = vector.load %arg3[%c0_7, %c0_8] : memref<1x128xf32, #tpu.memory_space<vmem>>, vector<1x128xf32>
    %23 = vector.broadcast %22 : vector<1x128xf32> to vector<2x128xf32>
    %24 = arith.addf %21, %23 : vector<2x128xf32>
    %25 = arith.truncf %24 : vector<2x128xf32> to vector<2x128xbf16>
    %c0_9 = arith.constant 0 : index
    %c0_10 = arith.constant 0 : index
    %26 = vector.load %arg4[%c0_9, %c0_10] : memref<128x128xbf16, #tpu.memory_space<vmem>>, vector<128x128xbf16>
    %cst_11 = arith.constant dense<0.000000e+00> : vector<2x128xf32>
    %27 = tpu.matmul %25, %26, %cst_11 {dimension_numbers = #tpu.dot_dimension_numbers<[1], [0], [0], [1], [0, 0, 1, 1], [], []>} : vector<2x128xbf16>, vector<128x128xbf16>, vector<2x128xf32> -> vector<2x128xf32>
    %c0_12 = arith.constant 0 : index
    %c0_13 = arith.constant 0 : index
    %28 = vector.load %arg5[%c0_12, %c0_13] : memref<1x128xf32, #tpu.memory_space<vmem>>, vector<1x128xf32>
    %29 = vector.broadcast %28 : vector<1x128xf32> to vector<2x128xf32>
    %30 = arith.addf %27, %29 : vector<2x128xf32>
    %c0_14 = arith.constant 0 : index
    %c0_15 = arith.constant 0 : index
    %31 = vector.load %arg6[%c0_14, %c0_15] : memref<2x128xf32, #tpu.memory_space<vmem>>, vector<2x128xf32>
    tpu.vector_store %arg6[%c0_14, %c0_15], %30 {strides = array<i32>} : memref<2x128xf32, #tpu.memory_space<vmem>>, vector<2x128xf32>,
    return
  }
  func.func @transform_0(%arg0: i32) -> (i32, i32) {
    %c0_i32 = arith.constant 0 : i32
    %c0_i32_0 = arith.constant 0 : i32
    %c0_i32_1 = arith.constant 0 : i32
    return %c0_i32, %c0_i32_0 : i32, i32
  }
  func.func @transform_1(%arg0: i32) -> (i32, i32) {
    %c0_i32 = arith.constant 0 : i32
    %c0_i32_0 = arith.constant 0 : i32
    %c0_i32_1 = arith.constant 0 : i32
    return %c0_i32, %c0_i32_0 : i32, i32
  }
  func.func @transform_2(%arg0: i32) -> (i32, i32) {
    %c0_i32 = arith.constant 0 : i32
    %c0_i32_0 = arith.constant 0 : i32
    %c0_i32_1 = arith.constant 0 : i32
    return %c0_i32, %c0_i32_0 : i32, i32
  }
  func.func @transform_3(%arg0: i32) -> (i32, i32) {
    %c0_i32 = arith.constant 0 : i32
    %c0_i32_0 = arith.constant 0 : i32
    return %c0_i32, %arg0 : i32, i32
  }
  func.func @transform_4(%arg0: i32) -> (i32, i32) {
    %c0_i32 = arith.constant 0 : i32
    %c0_i32_0 = arith.constant 0 : i32
    return %c0_i32, %arg0 : i32, i32
  }
  func.func @transform_5(%arg0: i32) -> (i32, i32) {
    %c0_i32 = arith.constant 0 : i32
    %c0_i32_0 = arith.constant 0 : i32
    return %c0_i32, %arg0 : i32, i32
  }
}

module attributes {stable_mosaic.version = 11 : i64} {
  func.func @_swiglu_matmul_bias_kernel(%arg0: i32, %arg1: memref<2x1024xf32, #tpu.memory_space<vmem>>, %arg2: memref<512x128xbf16, #tpu.memory_space<vmem>>, %arg3: memref<1x128xf32, #tpu.memory_space<vmem>>, %arg4: memref<2x128xf32, #tpu.memory_space<vmem>>) attributes {dimension_semantics = [#tpu.dimension_semantics<parallel>], iteration_bounds = array<i64: 1>, scalar_prefetch = 0 : i64, scratch_operands = 0 : i64, tpu.core_type = #tpu.core_type<tc>, window_params = [{pipeline_mode = #tpu.pipeline_mode<synchronous>, transform_indices = @transform_0, window_bounds = array<i64: 2, 1024>}, {transform_indices = @transform_1, window_bounds = array<i64: 512, 128>}, {transform_indices = @transform_2, window_bounds = array<i64: 1, 128>}, {transform_indices = @transform_3, window_bounds = array<i64: 2, 128>}]} {
    %c0 = arith.constant 0 : index
    %c0_0 = arith.constant 0 : index
    %0 = vector.load %arg1[%c0, %c0_0] : memref<2x1024xf32, #tpu.memory_space<vmem>>, vector<2x512xf32>
    %c0_1 = arith.constant 0 : index
    %c512 = arith.constant 512 : index
    %1 = vector.load %arg1[%c0_1, %c512] : memref<2x1024xf32, #tpu.memory_space<vmem>>, vector<2x512xf32>
    %2 = arith.negf %0 : vector<2x512xf32>
    %3 = math.exp %2 : vector<2x512xf32>
    %cst = arith.constant 1.000000e+00 : f32
    %4 = vector.broadcast %cst : f32 to vector<2x512xf32>
    %5 = arith.addf %4, %3 : vector<2x512xf32>
    %6 = arith.divf %4, %5 : vector<2x512xf32>
    %7 = arith.mulf %0, %6 : vector<2x512xf32>
    %8 = arith.mulf %7, %1 : vector<2x512xf32>
    %9 = arith.truncf %8 : vector<2x512xf32> to vector<2x512xbf16>
    %c0_2 = arith.constant 0 : index
    %c0_3 = arith.constant 0 : index
    %10 = vector.load %arg2[%c0_2, %c0_3] : memref<512x128xbf16, #tpu.memory_space<vmem>>, vector<512x128xbf16>
    %cst_4 = arith.constant dense<0.000000e+00> : vector<2x128xf32>
    %11 = tpu.matmul %9, %10, %cst_4 {dimension_numbers = #tpu.dot_dimension_numbers<[1], [0], [0], [1], [0, 0, 1, 1], [], []>} : vector<2x512xbf16>, vector<512x128xbf16>, vector<2x128xf32> -> vector<2x128xf32>
    %c0_5 = arith.constant 0 : index
    %c0_6 = arith.constant 0 : index
    %12 = vector.load %arg3[%c0_5, %c0_6] : memref<1x128xf32, #tpu.memory_space<vmem>>, vector<1x128xf32>
    %13 = vector.broadcast %12 : vector<1x128xf32> to vector<2x128xf32>
    %14 = arith.addf %11, %13 : vector<2x128xf32>
    %c0_7 = arith.constant 0 : index
    %c0_8 = arith.constant 0 : index
    %15 = vector.load %arg4[%c0_7, %c0_8] : memref<2x128xf32, #tpu.memory_space<vmem>>, vector<2x128xf32>
    tpu.vector_store %arg4[%c0_7, %c0_8], %14 {strides = array<i32>} : memref<2x128xf32, #tpu.memory_space<vmem>>, vector<2x128xf32>,
    return
  }
  func.func @transform_0(%arg0: i32) -> (i32, i32) {
    %c0_i32 = arith.constant 0 : i32
    %c0_i32_0 = arith.constant 0 : i32
    %c0_i32_1 = arith.constant 0 : i32
    return %c0_i32, %c0_i32_0 : i32, i32
  }
  func.func @transform_1(%arg0: i32) -> (i32, i32) {
    %c0_i32 = arith.constant 0 : i32
    %c0_i32_0 = arith.constant 0 : i32
    return %c0_i32, %arg0 : i32, i32
  }
  func.func @transform_2(%arg0: i32) -> (i32, i32) {
    %c0_i32 = arith.constant 0 : i32
    %c0_i32_0 = arith.constant 0 : i32
    return %c0_i32, %arg0 : i32, i32
  }
  func.func @transform_3(%arg0: i32) -> (i32, i32) {
    %c0_i32 = arith.constant 0 : i32
    %c0_i32_0 = arith.constant 0 : i32
    return %c0_i32, %arg0 : i32, i32
  }
}

</mosaic_0001>

<llo_original>
// kernel: forward_visual.7
$region0: #{forward_visual.7}
  #allocation0 [shape = 'u32[]', space=smem, size = 0x4, offset = 0x4, fixed_abs, tag = 'smem constant byte address 0x4 - core index']
  #allocation1 [shape = 'u32[144,128]{1,0:T(1,128)}', space=vmem, size = 0x12000, scoped, tag = 'internal scratch']
  %s0 = inlined_call_operand.vmem [shape: f32[2,128], index: 0, kind: input, shape index: {}]
  %s1 = inlined_call_operand.hbm [shape: bf16[128,128], index: 1, kind: input, shape index: {}]
  %s2 = inlined_call_operand.hbm [shape: f32[1,128], index: 2, kind: input, shape index: {}]
  %s3 = inlined_call_operand.vmem [shape: f32[2,128], index: 3, kind: output, shape index: {}]
  %s4 = sld [smem:[#allocation0]]
  $region30: #{forward_visual.7} parent=0
    _
  %s6 = ssub.s32 1, %s4
  %s7 = scalar_select 0, %s6, %s4
  $region1: #{forward_visual.7} parent=0
    #allocation2 [shape = 'u8[32768]{0}', space=vmem, size = 0x8000, scoped, tag = 'input window, operand 1, single buffered']
    #allocation3 [shape = 's32[1]{0}', space=sflag, size = 0x4, scoped, tag = 'scoped memory for forward_visual.7']
    #allocation4 [shape = 'u8[512]{0}', space=vmem, size = 0x400, scoped, tag = 'input window, operand 2, single buffered']
    #allocation5 [shape = 's32[1]{0}', space=sflag, size = 0x4, scoped, tag = 'scoped memory for forward_visual.7']
    %8 = vsyncpa [#allocation3], 0
    %9 = vsyncpa [#allocation5], 0
    // Predicated region
    $region2: #{forward_visual.7} parent=1 // pred_check
      _
    $region3: #{forward_visual.7} parent=1 // pred_check_branch
      %11 = sbr.rel (0) target = $region5
    $region4: #{forward_visual.7} parent=1 // pred_region
      _
    $region5: #{forward_visual.7} parent=1 // pred_fallthru
      _
    // Predicated region
    $region6: #{forward_visual.7} parent=1 // pred_check
      _
    $region7: #{forward_visual.7} parent=1 // pred_check_branch
      %13 = sbr.rel (0) target = $region9
    $region8: #{forward_visual.7} parent=1 // pred_region
      %s15 = ssub.s32 1024, 1024
      %16 = vsyncadd [#allocation3], %s15
      %s17 = sshll.u32 [#allocation2], 4
      %s18 = int_to_ptr.vmem [resolvable:$true] %s17
      %23 = dma.hbm_to_vmem [thread:$0]  %s1, 1024, %s18, [#allocation3], 64, 64, 4
    $region9: #{forward_visual.7} parent=1 // pred_fallthru
      _
    // Predicated region
    $region10: #{forward_visual.7} parent=1 // pred_check
      _
    $region11: #{forward_visual.7} parent=1 // pred_check_branch
      %25 = sbr.rel (0) target = $region13
    $region12: #{forward_visual.7} parent=1 // pred_region
      %s27 = ssub.s32 16, 16
      %28 = vsyncadd [#allocation5], %s27
      %s30 = sshll.u32 [#allocation4], 4
      %s31 = int_to_ptr.vmem [resolvable:$true] %s30
      %33 = dma.hbm_to_vmem [thread:$0]  %s2, 16, %s31, [#allocation5]
    $region13: #{forward_visual.7} parent=1 // pred_fallthru
      _
    // Predicated region
    $region14: #{forward_visual.7} parent=1 // pred_check
      _
    $region15: #{forward_visual.7} parent=1 // pred_check_branch
      %35 = sbr.rel (0) target = $region17
    $region16: #{forward_visual.7} parent=1 // pred_region
      %36 = dma.done [#allocation3], 1024
    $region17: #{forward_visual.7} parent=1 // pred_fallthru
      _
    // Predicated region
    $region18: #{forward_visual.7} parent=1 // pred_check
      _
    $region19: #{forward_visual.7} parent=1 // pred_check_branch
      %38 = sbr.rel (0) target = $region21
    $region20: #{forward_visual.7} parent=1 // pred_region
      %39 = dma.done [#allocation5], 16
    $region21: #{forward_visual.7} parent=1 // pred_fallthru
      _
    %v41 = vld [vmem:[%s0] sm:$0x3]
    %v42 = vpack.c.bf16 %v41, %v41
    %v43 = vld [vmem:[#allocation2] sm:$0xf]
    %v44 = vld [vmem:[#allocation2 + $0x4] sm:$0xf]
    %v45 = vld [vmem:[#allocation2 + $0x8] sm:$0xf]
    %v46 = vld [vmem:[#allocation2 + $0xc] sm:$0xf]
    %v47 = vld [vmem:[#allocation2 + $0x10] sm:$0xf]
    %v48 = vld [vmem:[#allocation2 + $0x14] sm:$0xf]
    %v49 = vld [vmem:[#allocation2 + $0x18] sm:$0xf]
    %v50 = vld [vmem:[#allocation2 + $0x1c] sm:$0xf]
    %v51 = vld [vmem:[#allocation2 + $0x20] sm:$0xf]
    %v52 = vld [vmem:[#allocation2 + $0x24] sm:$0xf]
    %v53 = vld [vmem:[#allocation2 + $0x28] sm:$0xf]
    %v54 = vld [vmem:[#allocation2 + $0x2c] sm:$0xf]
    %v55 = vld [vmem:[#allocation2 + $0x30] sm:$0xf]
    %v56 = vld [vmem:[#allocation2 + $0x34] sm:$0xf]
    %v57 = vld [vmem:[#allocation2 + $0x38] sm:$0xf]
    %v58 = vld [vmem:[#allocation2 + $0x3c] sm:$0xf]
    %v59 = vld [vmem:[#allocation4] sm:$0x1]
    %v61 = vlaneseq
    %v62 = vshrl.u32 %v61, 7
    %v63 = vsub.s32 0, %v62
    %v64 = vrot.slane %v59, %v63
    %v82 = vunpack.c.l.b16 %v43
    %v83 = vunpack.c.l.b16 %v44
    %v84 = vunpack.c.l.b16 %v45
    %v85 = vunpack.c.l.b16 %v46
    %v86 = vunpack.c.l.b16 %v47
    %v87 = vunpack.c.l.b16 %v48
    %v88 = vunpack.c.l.b16 %v49
    %v89 = vunpack.c.l.b16 %v50
    %v90 = vunpack.c.l.b16 %v51
    %v91 = vunpack.c.l.b16 %v52
    %v92 = vunpack.c.l.b16 %v53
    %v93 = vunpack.c.l.b16 %v54
    %v94 = vunpack.c.l.b16 %v55
    %v95 = vunpack.c.l.b16 %v56
    %v96 = vunpack.c.l.b16 %v57
    %v97 = vunpack.c.l.b16 %v58
    %v98 = vpack.c.b16 %v83, %v82
    %v99 = vpack.c.b16 %v85, %v84
    %v100 = vpack.c.b16 %v87, %v86
    %v101 = vpack.c.b16 %v89, %v88
    %v102 = vpack.c.b16 %v91, %v90
    %v103 = vpack.c.b16 %v93, %v92
    %v104 = vpack.c.b16 %v95, %v94
    %v105 = vpack.c.b16 %v97, %v96
    %114 = vmatprep.subr.bf16.mxu0 0
    %115 = vmatpush1.bf16.msra.mxu0 %v105
    %116 = vmatprep.subr.bf16.mxu0 0
    %117 = vmatpush1.bf16.msra.mxu0 %v104
    %118 = vmatprep.subr.bf16.mxu0 0
    %119 = vmatpush1.bf16.msra.mxu0 %v103
    %120 = vmatprep.subr.bf16.mxu0 0
    %121 = vmatpush1.bf16.msra.mxu0 %v102
    %122 = vmatprep.subr.bf16.mxu0 0
    %123 = vmatpush1.bf16.msra.mxu0 %v101
    %124 = vmatprep.subr.bf16.mxu0 0
    %125 = vmatpush1.bf16.msra.mxu0 %v100
    %126 = vmatprep.subr.bf16.mxu0 0
    %127 = vmatpush1.bf16.msra.mxu0 %v99
    %128 = vmatprep.subr.bf16.mxu0 0
    %129 = vmatpush1.bf16.msra.mxu0 %v98
    %130 = vmatprep.subr.bf16.mxu0 0
    %131 = vmatpush2.bf16.msra.mxu0 0
    %132 = vmatprep.subr.bf16.mxu0 0
    %133 = vmatpush2.bf16.msra.mxu0 0
    %134 = vmatprep.subr.bf16.mxu0 0
    %135 = vmatpush2.bf16.msra.mxu0 0
    %136 = vmatprep.subr.bf16.mxu0 0
    %137 = vmatpush2.bf16.msra.mxu0 0
    %138 = vmatprep.subr.bf16.mxu0 0
    %139 = vmatpush2.bf16.msra.mxu0 0
    %140 = vmatprep.subr.bf16.mxu0 0
    %141 = vmatpush2.bf16.msra.mxu0 0
    %142 = vmatprep.subr.bf16.mxu0 0
    %143 = vmatpush2.bf16.msra.mxu0 0
    %144 = vmatprep.subr.bf16.mxu0 0
    %145 = vmatpush2.bf16.msra.mxu0 0
    %146 = vmatprep.mubr.bf16.mxu0 0
    %147 = vmatmul.mubr.bf16.gmra.mxu0 %v42
    %v148 = vpop.f32.mrf.mxu0
    %v149 = vadd.f32 %v64, %v148
    %v150 = vpop.f32.mrf.mxu0
    %v151 = vpop.f32.mrf.mxu0
    %v152 = vpop.f32.mrf.mxu0
    %153 = vdwg.mxu0
    %154 = vst [vmem:[%s3] sm:$0x3] %v149
    // Predicated region
    $region22: #{forward_visual.7} parent=1 // pred_check
      _
    $region23: #{forward_visual.7} parent=1 // pred_check_branch
      %156 = sbr.rel (0) target = $region25
    $region24: #{forward_visual.7} parent=1 // pred_region
      _
    $region25: #{forward_visual.7} parent=1 // pred_fallthru
      _
    // Predicated region
    $region26: #{forward_visual.7} parent=1 // pred_check
      _
    $region27: #{forward_visual.7} parent=1 // pred_check_branch
      %158 = sbr.rel (0) target = $region29
    $region28: #{forward_visual.7} parent=1 // pred_region
      _
    $region29: #{forward_visual.7} parent=1 // pred_fallthru
      _
    %159 = vsyncpa [#allocation3], 1
    %160 = vsyncpa [#allocation5], 1

// kernel: forward_visual.10
$region0: #{forward_visual.10}
  #allocation0 [shape = 'u32[]', space=smem, size = 0x4, offset = 0x4, fixed_abs, tag = 'smem constant byte address 0x4 - core index']
  #allocation1 [shape = 'u32[144,128]{1,0:T(1,128)}', space=vmem, size = 0x12000, scoped, tag = 'internal scratch']
  %s0 = inlined_call_operand.vmem [shape: f32[2,128], index: 0, kind: input, shape index: {}]
  %s1 = inlined_call_operand.vmem [shape: f32[1,128], index: 1, kind: input, shape index: {}]
  %s2 = inlined_call_operand.vmem [shape: f32[1,128], index: 2, kind: input, shape index: {}]
  %s3 = inlined_call_operand.vmem [shape: bf16[128,1024], index: 3, kind: input, shape index: {}]
  %s4 = inlined_call_operand.vmem [shape: f32[1,1024], index: 4, kind: input, shape index: {}]
  %s5 = inlined_call_operand.vmem [shape: f32[2,1024], index: 5, kind: output, shape index: {}]
  %s6 = sld [smem:[#allocation0]]
  $region94: #{forward_visual.10} parent=0
    _
  %s8 = ssub.s32 1, %s6
  %s9 = scalar_select 0, %s8, %s6
  $region1: #{forward_visual.10} parent=0
    #allocation2 [shape = 'u8[65536]{0}', space=vmem, size = 0x10000, scoped, tag = 'input window, operand 3']
    loop: start=0, step=1, limit=10
    $region2: #{forward_visual.10} parent=1 // loop_pre_header
      _
    $region3: #{forward_visual.10} parent=1 // loop_header
      %s11 = sphi 0, %s15
      %p12 = scmp.ge.s32.totalorder %s11, 10
      %s19 = sphi 0, %s19
      %s21 = sphi 0, %s19
      %s22 = sphi 0, %s21
      %s36 = sphi 0, %s22
      %s40 = sphi 0, %s40
      %s42 = sphi 0, %s40
      %s43 = sphi 0, %s42
      %s57 = sphi 0, %s43
      %s61 = sphi 0, %s61
      %s63 = sphi 0, %s61
      %s64 = sphi 0, %s63
      %s78 = sphi 0, %s64
      %s84 = sphi 0, %s86
      %s87 = sphi 0, %s84
      %s88 = sphi 0, %s87
      %s104 = sphi 0, %s88
      %s110 = sphi 0, %s112
      %s113 = sphi 0, %s110
      %s114 = sphi 0, %s113
      %s130 = sphi 0, %s114
      %s136 = sphi 0, %s138
      %s139 = sphi 0, %s136
      %s140 = sphi 0, %s139
      %s156 = sphi 0, %s140
    $region4: #{forward_visual.10} parent=1 // loop_header_branch
      %14 = sbr.rel (%p12) target = $region8
    $region5: #{forward_visual.10} parent=1 // loop_body
      %s16 = ssub.s32 %s11, 1
      %s17 = ssub.s32 %s11, 2
      %s18 = sadd.s32 %s11, 1
      %s20 = sadd.s32 %s19, 1
      %p23 = scmp.eq.s32.totalorder %s11, 7
      %p24 = scmp.ne.s32.totalorder %s19, %s21
      %p25 = scmp.eq.s32.totalorder %s11, 0
      %p26 = por %p24, %p25
      %p27 = scmp.ne.s32.totalorder %s19, %s21
      %p28 = scmp.eq.s32.totalorder %s16, 7
      %p29 = por %p27, %p28
      %p30 = scmp.ne.s32.totalorder %s21, %s22
      %p31 = scmp.eq.s32.totalorder %s16, 0
      %p32 = por %p30, %p31
      %p33 = scmp.ne.s32.totalorder %s21, %s22
      %p34 = scmp.eq.s32.totalorder %s17, 7
      %p35 = por %p33, %p34
      %p37 = scmp.ne.s32.totalorder %s22, %s36
      %p38 = scmp.eq.s32.totalorder %s17, 0
      %p39 = por %p37, %p38
      %s41 = sadd.s32 %s40, 1
      %p44 = scmp.eq.s32.totalorder %s11, 7
      %p45 = scmp.ne.s32.totalorder %s40, %s42
      %p46 = scmp.eq.s32.totalorder %s11, 0
      %p47 = por %p45, %p46
      %p48 = scmp.ne.s32.totalorder %s40, %s42
      %p49 = scmp.eq.s32.totalorder %s16, 7
      %p50 = por %p48, %p49
      %p51 = scmp.ne.s32.totalorder %s42, %s43
      %p52 = scmp.eq.s32.totalorder %s16, 0
      %p53 = por %p51, %p52
      %p54 = scmp.ne.s32.totalorder %s42, %s43
      %p55 = scmp.eq.s32.totalorder %s17, 7
      %p56 = por %p54, %p55
      %p58 = scmp.ne.s32.totalorder %s43, %s57
      %p59 = scmp.eq.s32.totalorder %s17, 0
      %p60 = por %p58, %p59
      %s62 = sadd.s32 %s61, 1
      %p65 = scmp.eq.s32.totalorder %s11, 7
      %p66 = scmp.ne.s32.totalorder %s61, %s63
      %p67 = scmp.eq.s32.totalorder %s11, 0
      %p68 = por %p66, %p67
      %p69 = scmp.ne.s32.totalorder %s61, %s63
      %p70 = scmp.eq.s32.totalorder %s16, 7
      %p71 = por %p69, %p70
      %p72 = scmp.ne.s32.totalorder %s63, %s64
      %p73 = scmp.eq.s32.totalorder %s16, 0
      %p74 = por %p72, %p73
      %p75 = scmp.ne.s32.totalorder %s63, %s64
      %p76 = scmp.eq.s32.totalorder %s17, 7
      %p77 = por %p75, %p76
      %p79 = scmp.ne.s32.totalorder %s64, %s78
      %p80 = scmp.eq.s32.totalorder %s17, 0
      %p81 = por %p79, %p80
      %s82 = ssub.s32 %s11, %s18
      %p83 = scmp.eq.s32.totalorder %s82, 0
      %s85 = sadd.s32 %s84, 1
      %s86 = scalar_select %p83, %s84, %s85
      %p89 = pneg %p83
      %p90 = scmp.eq.s32.totalorder %s11, 7
      %p91 = por %p89, %p90
      %p92 = scmp.ne.s32.totalorder %s84, %s87
      %p93 = scmp.eq.s32.totalorder %s11, 0
      %p94 = por %p92, %p93
      %p95 = scmp.ne.s32.totalorder %s84, %s87
      %p96 = scmp.eq.s32.totalorder %s16, 7
      %p97 = por %p95, %p96
      %p98 = scmp.ne.s32.totalorder %s87, %s88
      %p99 = scmp.eq.s32.totalorder %s16, 0
      %p100 = por %p98, %p99
      %p101 = scmp.ne.s32.totalorder %s87, %s88
      %p102 = scmp.eq.s32.totalorder %s17, 7
      %p103 = por %p101, %p102
      %p105 = scmp.ne.s32.totalorder %s88, %s104
      %p106 = scmp.eq.s32.totalorder %s17, 0
      %p107 = por %p105, %p106
      %s108 = ssub.s32 %s11, %s18
      %p109 = scmp.eq.s32.totalorder %s108, 0
      %s111 = sadd.s32 %s110, 1
      %s112 = scalar_select %p109, %s110, %s111
      %p115 = pneg %p109
      %p116 = scmp.eq.s32.totalorder %s11, 7
      %p117 = por %p115, %p116
      %p118 = scmp.ne.s32.totalorder %s110, %s113
      %p119 = scmp.eq.s32.totalorder %s11, 0
      %p120 = por %p118, %p119
      %p121 = scmp.ne.s32.totalorder %s110, %s113
      %p122 = scmp.eq.s32.totalorder %s16, 7
      %p123 = por %p121, %p122
      %p124 = scmp.ne.s32.totalorder %s113, %s114
      %p125 = scmp.eq.s32.totalorder %s16, 0
      %p126 = por %p124, %p125
      %p127 = scmp.ne.s32.totalorder %s113, %s114
      %p128 = scmp.eq.s32.totalorder %s17, 7
      %p129 = por %p127, %p128
      %p131 = scmp.ne.s32.totalorder %s114, %s130
      %p132 = scmp.eq.s32.totalorder %s17, 0
      %p133 = por %p131, %p132
      %s134 = ssub.s32 %s11, %s18
      %p135 = scmp.eq.s32.totalorder %s134, 0
      %s137 = sadd.s32 %s136, 1
      %s138 = scalar_select %p135, %s136, %s137
      %p141 = pneg %p135
      %p142 = scmp.eq.s32.totalorder %s11, 7
      %p143 = por %p141, %p142
      %p144 = scmp.ne.s32.totalorder %s136, %s139
      %p145 = scmp.eq.s32.totalorder %s11, 0
      %p146 = por %p144, %p145
      %p147 = scmp.ne.s32.totalorder %s136, %s139
      %p148 = scmp.eq.s32.totalorder %s16, 7
      %p149 = por %p147, %p148
      %p150 = scmp.ne.s32.totalorder %s139, %s140
      %p151 = scmp.eq.s32.totalorder %s16, 0
      %p152 = por %p150, %p151
      %p153 = scmp.ne.s32.totalorder %s139, %s140
      %p154 = scmp.eq.s32.totalorder %s17, 7
      %p155 = por %p153, %p154
      %p157 = scmp.ne.s32.totalorder %s140, %s156
      %p158 = scmp.eq.s32.totalorder %s17, 0
      %p159 = por %p157, %p158
      %p160 = scmp.le.s32.totalorder 1, %s11
      %p161 = scmp.lt.s32.totalorder %s11, 9
      %p162 = pnand %p160, %p161
      %p163 = pneg %p162
      // Predicated region
      $region9: #{forward_visual.10} parent=5 // pred_check
        _
      $region10: #{forward_visual.10} parent=5 // pred_check_branch
        %165 = sbr.rel (%p162) target = $region12
      $region11: #{forward_visual.10} parent=5 // pred_region
        %s166 = ssub.s32 %s11, 1
        // Predicated region
        $region13: #{forward_visual.10} parent=11 // pred_check
          %p167 = pneg %p32
        $region14: #{forward_visual.10} parent=11 // pred_check_branch
          %169 = sbr.rel (%p167) target = $region16
        $region15: #{forward_visual.10} parent=11 // pred_region
          _
        $region16: #{forward_visual.10} parent=11 // pred_fallthru
          _
        // Predicated region
        $region17: #{forward_visual.10} parent=11 // pred_check
          %p170 = pneg %p53
        $region18: #{forward_visual.10} parent=11 // pred_check_branch
          %172 = sbr.rel (%p170) target = $region20
        $region19: #{forward_visual.10} parent=11 // pred_region
          _
        $region20: #{forward_visual.10} parent=11 // pred_fallthru
          _
        // Predicated region
        $region21: #{forward_visual.10} parent=11 // pred_check
          %p173 = pneg %p74
        $region22: #{forward_visual.10} parent=11 // pred_check_branch
          %175 = sbr.rel (%p173) target = $region24
        $region23: #{forward_visual.10} parent=11 // pred_region
          _
        $region24: #{forward_visual.10} parent=11 // pred_fallthru
          _
      $region12: #{forward_visual.10} parent=5 // pred_fallthru
        _
      %p176 = scmp.lt.s32.totalorder %s11, 8
      // Predicated region
      $region25: #{forward_visual.10} parent=5 // pred_check
        %p177 = pneg %p176
      $region26: #{forward_visual.10} parent=5 // pred_check_branch
        %179 = sbr.rel (%p177) target = $region28
      $region27: #{forward_visual.10} parent=5 // pred_region
        // Predicated region
        $region29: #{forward_visual.10} parent=27 // pred_check
          %p180 = pneg %p94
        $region30: #{forward_visual.10} parent=27 // pred_check_branch
          %182 = sbr.rel (%p180) target = $region32
        $region31: #{forward_visual.10} parent=27 // pred_region
          %s183 = sand.u32 %s84, 1
          %s184 = sand.u32 %s84, 1
          %s185 = smul.addr %s184, 64
          %s186 = scalar_lea.vmem [#allocation2], %s185
          %s187 = smul.addr %s11, 4
          %s188 = scalar_lea.vmem %s3, %s187
          // Predicated region
          $region33: #{forward_visual.10} parent=31 // pred_check
            _
          $region34: #{forward_visual.10} parent=31 // pred_check_branch
            %190 = sbr.rel (0) target = $region36
          $region35: #{forward_visual.10} parent=31 // pred_region
            // Predicated region
            $region37: #{forward_visual.10} parent=35 // pred_check
              _
            $region38: #{forward_visual.10} parent=35 // pred_check_branch
              %192 = sbr.rel target = $region40
            $region39: #{forward_visual.10} parent=35 // pred_region
              // Predicated region
              $region52: #{forward_visual.10} parent=39 // pred_check
                _
              $region53: #{forward_visual.10} parent=39 // pred_check_branch
                %238 = sbr.rel (0) target = $region55
              $region54: #{forward_visual.10} parent=39 // pred_region
                loop: start=0, step=1, limit=1
                $region56: #{forward_visual.10} parent=54 // loop_pre_header
                  _
                $region57: #{forward_visual.10} parent=54 // loop_header
                  %s240 = sphi 0, %s244
                  %p241 = scmp.ge.s32.totalorder %s240, 1
                  %s245 = sphi %s188, %s188
                  %s246 = sphi %s186, %s186
                $region58: #{forward_visual.10} parent=54 // loop_header_branch
                  %243 = sbr.rel (%p241) target = $region62
                $region59: #{forward_visual.10} parent=54 // loop_body
                  _
                $region60: #{forward_visual.10} parent=54 // loop_footer
                  %s244 = sadd.s32 1, %s240
                $region61: #{forward_visual.10} parent=54 // loop_footer_branch
                  %239 = sbr.rel target = $region57
                $region62: #{forward_visual.10} parent=54 // loop_exit
                  _
                %s248 = ssub.s32 16, 1
                loop: start=0, step=1, limit=1
                $region63: #{forward_visual.10} parent=54 // loop_pre_header
                  _
                $region64: #{forward_visual.10} parent=54 // loop_header
                  %s250 = sphi 0, %s254
                  %p251 = scmp.ge.s32.totalorder %s250, 1
                  %s255 = sphi %s188, %s188
                  %s256 = sphi %s186, %s186
                $region65: #{forward_visual.10} parent=54 // loop_header_branch
                  %253 = sbr.rel (%p251) target = $region69
                $region66: #{forward_visual.10} parent=54 // loop_body
                  %v257 = vld [vmem:[%s255] sm:%s248]
                  %258 = vst [vmem:[%s256] sm:%s248] %v257
                  %v259 = vld [vmem:[%s255 + $0x20] sm:%s248]
                  %260 = vst [vmem:[%s256 + $0x4] sm:%s248] %v259
                  %v261 = vld [vmem:[%s255 + $0x40] sm:%s248]
                  %262 = vst [vmem:[%s256 + $0x8] sm:%s248] %v261
                  %v263 = vld [vmem:[%s255 + $0x60] sm:%s248]
                  %264 = vst [vmem:[%s256 + $0xc] sm:%s248] %v263
                  %v265 = vld [vmem:[%s255 + $0x80] sm:%s248]
                  %266 = vst [vmem:[%s256 + $0x10] sm:%s248] %v265
                  %v267 = vld [vmem:[%s255 + $0xa0] sm:%s248]
                  %268 = vst [vmem:[%s256 + $0x14] sm:%s248] %v267
                  %v269 = vld [vmem:[%s255 + $0xc0] sm:%s248]
                  %270 = vst [vmem:[%s256 + $0x18] sm:%s248] %v269
                  %v271 = vld [vmem:[%s255 + $0xe0] sm:%s248]
                  %272 = vst [vmem:[%s256 + $0x1c] sm:%s248] %v271
                  %v273 = vld [vmem:[%s255 + $0x100] sm:%s248]
                  %274 = vst [vmem:[%s256 + $0x20] sm:%s248] %v273
                  %v275 = vld [vmem:[%s255 + $0x120] sm:%s248]
                  %276 = vst [vmem:[%s256 + $0x24] sm:%s248] %v275
                  %v277 = vld [vmem:[%s255 + $0x140] sm:%s248]
                  %278 = vst [vmem:[%s256 + $0x28] sm:%s248] %v277
                  %v279 = vld [vmem:[%s255 + $0x160] sm:%s248]
                  %280 = vst [vmem:[%s256 + $0x2c] sm:%s248] %v279
                  %v281 = vld [vmem:[%s255 + $0x180] sm:%s248]
                  %282 = vst [vmem:[%s256 + $0x30] sm:%s248] %v281
                  %v283 = vld [vmem:[%s255 + $0x1a0] sm:%s248]
                  %284 = vst [vmem:[%s256 + $0x34] sm:%s248] %v283
                  %v285 = vld [vmem:[%s255 + $0x1c0] sm:%s248]
                  %286 = vst [vmem:[%s256 + $0x38] sm:%s248] %v285
                  %v287 = vld [vmem:[%s255 + $0x1e0] sm:%s248]
                  %288 = vst [vmem:[%s256 + $0x3c] sm:%s248] %v287
                $region67: #{forward_visual.10} parent=54 // loop_footer
                  %s254 = sadd.s32 1, %s250
                $region68: #{forward_visual.10} parent=54 // loop_footer_branch
                  %249 = sbr.rel target = $region64
                $region69: #{forward_visual.10} parent=54 // loop_exit
                  _
              $region55: #{forward_visual.10} parent=39 // pred_fallthru
                _
            $region40: #{forward_visual.10} parent=35 // pred_fallthru
              _
            // Predicated region
            $region41: #{forward_visual.10} parent=35 // pred_check
              _
            $region42: #{forward_visual.10} parent=35 // pred_check_branch
              %194 = sbr.rel (0) target = $region44
            $region43: #{forward_visual.10} parent=35 // pred_region
              %s196 = ssub.s32 16, 1
              loop: start=0, step=1, limit=1
              $region45: #{forward_visual.10} parent=43 // loop_pre_header
                _
              $region46: #{forward_visual.10} parent=43 // loop_header
                %s198 = sphi 0, %s202
                %p199 = scmp.ge.s32.totalorder %s198, 1
                %s203 = sphi %s188, %s188
                %s204 = sphi %s186, %s186
              $region47: #{forward_visual.10} parent=43 // loop_header_branch
                %201 = sbr.rel (%p199) target = $region51
              $region48: #{forward_visual.10} parent=43 // loop_body
                %v205 = vld [vmem:[%s203] sm:%s196]
                %206 = vst [vmem:[%s204] sm:%s196] %v205
                %v207 = vld [vmem:[%s203 + $0x20] sm:%s196]
                %208 = vst [vmem:[%s204 + $0x4] sm:%s196] %v207
                %v209 = vld [vmem:[%s203 + $0x40] sm:%s196]
                %210 = vst [vmem:[%s204 + $0x8] sm:%s196] %v209
                %v211 = vld [vmem:[%s203 + $0x60] sm:%s196]
                %212 = vst [vmem:[%s204 + $0xc] sm:%s196] %v211
                %v213 = vld [vmem:[%s203 + $0x80] sm:%s196]
                %214 = vst [vmem:[%s204 + $0x10] sm:%s196] %v213
                %v215 = vld [vmem:[%s203 + $0xa0] sm:%s196]
                %216 = vst [vmem:[%s204 + $0x14] sm:%s196] %v215
                %v217 = vld [vmem:[%s203 + $0xc0] sm:%s196]
                %218 = vst [vmem:[%s204 + $0x18] sm:%s196] %v217
                %v219 = vld [vmem:[%s203 + $0xe0] sm:%s196]
                %220 = vst [vmem:[%s204 + $0x1c] sm:%s196] %v219
                %v221 = vld [vmem:[%s203 + $0x100] sm:%s196]
                %222 = vst [vmem:[%s204 + $0x20] sm:%s196] %v221
                %v223 = vld [vmem:[%s203 + $0x120] sm:%s196]
                %224 = vst [vmem:[%s204 + $0x24] sm:%s196] %v223
                %v225 = vld [vmem:[%s203 + $0x140] sm:%s196]
                %226 = vst [vmem:[%s204 + $0x28] sm:%s196] %v225
                %v227 = vld [vmem:[%s203 + $0x160] sm:%s196]
                %228 = vst [vmem:[%s204 + $0x2c] sm:%s196] %v227
                %v229 = vld [vmem:[%s203 + $0x180] sm:%s196]
                %230 = vst [vmem:[%s204 + $0x30] sm:%s196] %v229
                %v231 = vld [vmem:[%s203 + $0x1a0] sm:%s196]
                %232 = vst [vmem:[%s204 + $0x34] sm:%s196] %v231
                %v233 = vld [vmem:[%s203 + $0x1c0] sm:%s196]
                %234 = vst [vmem:[%s204 + $0x38] sm:%s196] %v233
                %v235 = vld [vmem:[%s203 + $0x1e0] sm:%s196]
                %236 = vst [vmem:[%s204 + $0x3c] sm:%s196] %v235
              $region49: #{forward_visual.10} parent=43 // loop_footer
                %s202 = sadd.s32 1, %s198
              $region50: #{forward_visual.10} parent=43 // loop_footer_branch
                %197 = sbr.rel target = $region46
              $region51: #{forward_visual.10} parent=43 // loop_exit
                _
            $region44: #{forward_visual.10} parent=35 // pred_fallthru
              _
          $region36: #{forward_visual.10} parent=31 // pred_fallthru
            _
          %289 = vnop
        $region32: #{forward_visual.10} parent=27 // pred_fallthru
          _
        // Predicated region
        $region70: #{forward_visual.10} parent=27 // pred_check
          %p290 = pneg %p120
        $region71: #{forward_visual.10} parent=27 // pred_check_branch
          %292 = sbr.rel (%p290) target = $region73
        $region72: #{forward_visual.10} parent=27 // pred_region
          %p293 = scmp.lt.s32.totalorder %s11, 7
          %s294 = scalar_select %p293, %s11, 7
          %s295 = scalar_lea.vmem %s4, %s294
        $region73: #{forward_visual.10} parent=27 // pred_fallthru
          _
      $region28: #{forward_visual.10} parent=5 // pred_fallthru
        _
      %p296 = scmp.le.s32.totalorder 1, %s11
      %p297 = scmp.lt.s32.totalorder %s11, 9
      %p298 = pnand %p296, %p297
      %p299 = pneg %p298
      // Predicated region
      $region74: #{forward_visual.10} parent=5 // pred_check
        _
      $region75: #{forward_visual.10} parent=5 // pred_check_branch
        %301 = sbr.rel (%p298) target = $region77
      $region76: #{forward_visual.10} parent=5 // pred_region
        %s302 = ssub.s32 %s11, 1
        %s303 = sand.u32 %s87, 1
        %s304 = sand.u32 %s87, 1
        %s305 = smul.addr %s304, 64
        %s306 = scalar_lea.vmem [#allocation2], %s305
        // Predicated region
        $region78: #{forward_visual.10} parent=76 // pred_check
          %p307 = pneg %p100
        $region79: #{forward_visual.10} parent=76 // pred_check_branch
          %309 = sbr.rel (%p307) target = $region81
        $region80: #{forward_visual.10} parent=76 // pred_region
          _
        $region81: #{forward_visual.10} parent=76 // pred_fallthru
          _
        %p310 = pneg %p32
        %p311 = pneg %p29
        %p312 = pneg %p53
        %p313 = pneg %p50
        %p314 = pneg %p74
        %p315 = pneg %p71
        %s316 = sand.u32 %s87, 1
        %s317 = sand.u32 %s87, 1
        %s318 = smul.addr %s317, 64
        %s319 = scalar_lea.vmem [#allocation2], %s318
        %p320 = pneg %p100
        %p321 = pneg %p97
        %p322 = scmp.lt.s32.totalorder %s16, 7
        %s323 = scalar_select %p322, %s16, 7
        %s324 = scalar_lea.vmem %s4, %s323
        %p325 = pneg %p126
        %p326 = pneg %p123
        %p327 = pneg %p152
        %p328 = pneg %p149
        %p329 = scmp.lt.s32.totalorder %s16, 7
        %s330 = scalar_select %p329, %s16, 7
        %s331 = smul.addr %s330, 2
        %s332 = scalar_lea.vmem %s5, %s331
        %p333 = scmp.lt.s32.totalorder %s16, 7
        %s334 = scalar_select %p333, %s16, 7
        %s335 = scalar_lea.vmem %s4, %s334
        %p336 = scmp.lt.s32.totalorder %s16, 7
        %s337 = scalar_select %p336, %s16, 7
        %s338 = smul.addr %s337, 2
        %s339 = scalar_lea.vmem %s5, %s338
        %v341 = vld [vmem:[%s0] sm:$0x3]
        %vm342 = vcmask 1041408
        %v343 = vsel %vm342, %v341, 0.0
        %344 = vadd.xlane.f32.xlu0 %v343
        %v345 = vpop.xlane.xlu0 %344
        %v346 = vrcp.pop 128.0
        %v347 = vmul.f32 %v345, %v346
        %v348 = vsub.f32 %v341, %v347
        %v349 = vmul.f32 %v348, %v348
        %v350 = vsel %vm342, %v349, 0.0
        %351 = vadd.xlane.f32.xlu0 %v350
        %v352 = vpop.xlane.xlu0 %351
        %v353 = vmul.f32 %v352, %v346
        %v354 = vadd.f32 %v353, 1e-05
        %v355 = vrsqrt.pop %v354
        %v356 = vmul.f32 %v348, %v355
        %v357 = vld [vmem:[%s1] sm:$0x1]
        %v359 = vlaneseq
        %v360 = vshrl.u32 %v359, 7
        %v361 = vsub.s32 0, %v360
        %v362 = vrot.slane %v357, %v361
        %v364 = vmul.f32 %v356, %v362
        %v365 = vld [vmem:[%s2] sm:$0x1]
        %v367 = vlaneseq
        %v368 = vshrl.u32 %v367, 7
        %v369 = vsub.s32 0, %v368
        %v370 = vrot.slane %v365, %v369
        %v372 = vadd.f32 %v364, %v370
        %v373 = vpack.c.bf16 %v372, %v372
        %v374 = vld [vmem:[%s306] sm:$0xf]
        %v375 = vld [vmem:[%s306 + $0x4] sm:$0xf]
        %v376 = vld [vmem:[%s306 + $0x8] sm:$0xf]
        %v377 = vld [vmem:[%s306 + $0xc] sm:$0xf]
        %v378 = vld [vmem:[%s306 + $0x10] sm:$0xf]
        %v379 = vld [vmem:[%s306 + $0x14] sm:$0xf]
        %v380 = vld [vmem:[%s306 + $0x18] sm:$0xf]
        %v381 = vld [vmem:[%s306 + $0x1c] sm:$0xf]
        %v382 = vld [vmem:[%s306 + $0x20] sm:$0xf]
        %v383 = vld [vmem:[%s306 + $0x24] sm:$0xf]
        %v384 = vld [vmem:[%s306 + $0x28] sm:$0xf]
        %v385 = vld [vmem:[%s306 + $0x2c] sm:$0xf]
        %v386 = vld [vmem:[%s306 + $0x30] sm:$0xf]
        %v387 = vld [vmem:[%s306 + $0x34] sm:$0xf]
        %v388 = vld [vmem:[%s306 + $0x38] sm:$0xf]
        %v389 = vld [vmem:[%s306 + $0x3c] sm:$0xf]
        %v390 = vld [vmem:[%s335] sm:$0x1]
        %v392 = vlaneseq
        %v393 = vshrl.u32 %v392, 7
        %v394 = vsub.s32 0, %v393
        %v395 = vrot.slane %v390, %v394
        %v413 = vunpack.c.l.b16 %v374
        %v414 = vunpack.c.l.b16 %v375
        %v415 = vunpack.c.l.b16 %v376
        %v416 = vunpack.c.l.b16 %v377
        %v417 = vunpack.c.l.b16 %v378
        %v418 = vunpack.c.l.b16 %v379
        %v419 = vunpack.c.l.b16 %v380
        %v420 = vunpack.c.l.b16 %v381
        %v421 = vunpack.c.l.b16 %v382
        %v422 = vunpack.c.l.b16 %v383
        %v423 = vunpack.c.l.b16 %v384
        %v424 = vunpack.c.l.b16 %v385
        %v425 = vunpack.c.l.b16 %v386
        %v426 = vunpack.c.l.b16 %v387
        %v427 = vunpack.c.l.b16 %v388
        %v428 = vunpack.c.l.b16 %v389
        %v429 = vpack.c.b16 %v414, %v413
        %v430 = vpack.c.b16 %v416, %v415
        %v431 = vpack.c.b16 %v418, %v417
        %v432 = vpack.c.b16 %v420, %v419
        %v433 = vpack.c.b16 %v422, %v421
        %v434 = vpack.c.b16 %v424, %v423
        %v435 = vpack.c.b16 %v426, %v425
        %v436 = vpack.c.b16 %v428, %v427
        %445 = vmatprep.subr.bf16.mxu0 0
        %446 = vmatpush1.bf16.msra.mxu0 %v436
        %447 = vmatprep.subr.bf16.mxu0 0
        %448 = vmatpush1.bf16.msra.mxu0 %v435
        %449 = vmatprep.subr.bf16.mxu0 0
        %450 = vmatpush1.bf16.msra.mxu0 %v434
        %451 = vmatprep.subr.bf16.mxu0 0
        %452 = vmatpush1.bf16.msra.mxu0 %v433
        %453 = vmatprep.subr.bf16.mxu0 0
        %454 = vmatpush1.bf16.msra.mxu0 %v432
        %455 = vmatprep.subr.bf16.mxu0 0
        %456 = vmatpush1.bf16.msra.mxu0 %v431
        %457 = vmatprep.subr.bf16.mxu0 0
        %458 = vmatpush1.bf16.msra.mxu0 %v430
        %459 = vmatprep.subr.bf16.mxu0 0
        %460 = vmatpush1.bf16.msra.mxu0 %v429
        %461 = vmatprep.subr.bf16.mxu0 0
        %462 = vmatpush2.bf16.msra.mxu0 0
        %463 = vmatprep.subr.bf16.mxu0 0
        %464 = vmatpush2.bf16.msra.mxu0 0
        %465 = vmatprep.subr.bf16.mxu0 0
        %466 = vmatpush2.bf16.msra.mxu0 0
        %467 = vmatprep.subr.bf16.mxu0 0
        %468 = vmatpush2.bf16.msra.mxu0 0
        %469 = vmatprep.subr.bf16.mxu0 0
        %470 = vmatpush2.bf16.msra.mxu0 0
        %471 = vmatprep.subr.bf16.mxu0 0
        %472 = vmatpush2.bf16.msra.mxu0 0
        %473 = vmatprep.subr.bf16.mxu0 0
        %474 = vmatpush2.bf16.msra.mxu0 0
        %475 = vmatprep.subr.bf16.mxu0 0
        %476 = vmatpush2.bf16.msra.mxu0 0
        %477 = vmatprep.mubr.bf16.mxu0 0
        %478 = vmatmul.mubr.bf16.gmra.mxu0 %v373
        %v479 = vpop.f32.mrf.mxu0
        %v480 = vadd.f32 %v395, %v479
        %v481 = vpop.f32.mrf.mxu0
        %v482 = vpop.f32.mrf.mxu0
        %v483 = vpop.f32.mrf.mxu0
        %484 = vdwg.mxu0
        %485 = vst [vmem:[%s339] sm:$0x3] %v480
        %p486 = scmp.lt.s32.totalorder %s16, 7
        %s487 = scalar_select %p486, %s16, 7
        %s488 = smul.addr %s487, 2
        %s489 = scalar_lea.vmem %s5, %s488
        // Predicated region
        $region82: #{forward_visual.10} parent=76 // pred_check
          %p490 = pneg %p149
        $region83: #{forward_visual.10} parent=76 // pred_check_branch
          %492 = sbr.rel (%p490) target = $region85
        $region84: #{forward_visual.10} parent=76 // pred_region
          _
        $region85: #{forward_visual.10} parent=76 // pred_fallthru
          _
      $region77: #{forward_visual.10} parent=5 // pred_fallthru
        _
      %p493 = scmp.le.s32.totalorder 2, %s11
      // Predicated region
      $region86: #{forward_visual.10} parent=5 // pred_check
        %p494 = pneg %p493
      $region87: #{forward_visual.10} parent=5 // pred_check_branch
        %496 = sbr.rel (%p494) target = $region89
      $region88: #{forward_visual.10} parent=5 // pred_region
        %s497 = ssub.s32 %s11, 2
        // Predicated region
        $region90: #{forward_visual.10} parent=88 // pred_check
          %p498 = pneg %p155
        $region91: #{forward_visual.10} parent=88 // pred_check_branch
          %500 = sbr.rel (%p498) target = $region93
        $region92: #{forward_visual.10} parent=88 // pred_region
          %p501 = scmp.lt.s32.totalorder %s17, 7
          %s502 = scalar_select %p501, %s17, 7
          %s503 = smul.addr %s502, 2
          %s504 = scalar_lea.vmem %s5, %s503
        $region93: #{forward_visual.10} parent=88 // pred_fallthru
          _
      $region89: #{forward_visual.10} parent=5 // pred_fallthru
        _
    $region6: #{forward_visual.10} parent=1 // loop_footer
      %s15 = sadd.s32 1, %s11
    $region7: #{forward_visual.10} parent=1 // loop_footer_branch
      %10 = sbr.rel target = $region3
    $region8: #{forward_visual.10} parent=1 // loop_exit
      _

// kernel: forward_visual.8
$region0: #{forward_visual.8}
  #allocation0 [shape = 'u32[]', space=smem, size = 0x4, offset = 0x4, fixed_abs, tag = 'smem constant byte address 0x4 - core index']
  #allocation1 [shape = 'u32[144,128]{1,0:T(1,128)}', space=vmem, size = 0x12000, scoped, tag = 'internal scratch']
  %s0 = inlined_call_operand.vmem [shape: f32[2,128], index: 0, kind: input, shape index: {}]
  %s1 = inlined_call_operand.hbm [shape: f32[1,128], index: 1, kind: input, shape index: {}]
  %s2 = inlined_call_operand.hbm [shape: f32[1,128], index: 2, kind: input, shape index: {}]
  %s3 = inlined_call_operand.hbm [shape: bf16[128,1024], index: 3, kind: input, shape index: {}]
  %s4 = inlined_call_operand.hbm [shape: f32[1,1024], index: 4, kind: input, shape index: {}]
  %s5 = inlined_call_operand.vmem [shape: f32[2,1024], index: 5, kind: output, shape index: {}]
  %s6 = sld [smem:[#allocation0]]
  $region69: #{forward_visual.8} parent=0
    _
  %s8 = ssub.s32 1, %s6
  %s9 = scalar_select 0, %s8, %s6
  $region1: #{forward_visual.8} parent=0
    #allocation2 [shape = 'u8[512]{0}', space=vmem, size = 0x400, scoped, tag = 'input window, operand 1, single buffered']
    #allocation3 [shape = 's32[2]{0}', space=sflag, size = 0x8, scoped, tag = 'scoped memory for forward_visual.8']
    #allocation4 [shape = 'u8[512]{0}', space=vmem, size = 0x400, scoped, tag = 'input window, operand 2, single buffered']
    #allocation5 [shape = 's32[1]{0}', space=sflag, size = 0x4, scoped, tag = 'scoped memory for forward_visual.8']
    #allocation6 [shape = 'u8[65536]{0}', space=vmem, size = 0x10000, scoped, tag = 'input window, operand 3']
    #allocation7 [shape = 'u8[1024]{0}', space=vmem, size = 0x400, scoped, tag = 'input window, operand 4']
    %10 = vsyncpa [#allocation3], 0
    %11 = vsyncpa [#allocation5], 0
    loop: start=0, step=1, limit=10
    $region2: #{forward_visual.8} parent=1 // loop_pre_header
      _
    $region3: #{forward_visual.8} parent=1 // loop_header
      %s13 = sphi 0, %s17
      %p14 = scmp.ge.s32.totalorder %s13, 10
      %s21 = sphi 0, %s21
      %s23 = sphi 0, %s21
      %s24 = sphi 0, %s23
      %s38 = sphi 0, %s24
      %s42 = sphi 0, %s42
      %s44 = sphi 0, %s42
      %s45 = sphi 0, %s44
      %s59 = sphi 0, %s45
      %s63 = sphi 0, %s63
      %s65 = sphi 0, %s63
      %s66 = sphi 0, %s65
      %s80 = sphi 0, %s66
      %s86 = sphi 0, %s88
      %s89 = sphi 0, %s86
      %s90 = sphi 0, %s89
      %s106 = sphi 0, %s90
      %s112 = sphi 0, %s114
      %s115 = sphi 0, %s112
      %s116 = sphi 0, %s115
      %s132 = sphi 0, %s116
      %s138 = sphi 0, %s140
      %s141 = sphi 0, %s138
      %s142 = sphi 0, %s141
      %s158 = sphi 0, %s142
    $region4: #{forward_visual.8} parent=1 // loop_header_branch
      %16 = sbr.rel (%p14) target = $region8
    $region5: #{forward_visual.8} parent=1 // loop_body
      %s18 = ssub.s32 %s13, 1
      %s19 = ssub.s32 %s13, 2
      %s20 = sadd.s32 %s13, 1
      %s22 = sadd.s32 %s21, 1
      %p25 = scmp.eq.s32.totalorder %s13, 7
      %p26 = scmp.ne.s32.totalorder %s21, %s23
      %p27 = scmp.eq.s32.totalorder %s13, 0
      %p28 = por %p26, %p27
      %p29 = scmp.ne.s32.totalorder %s21, %s23
      %p30 = scmp.eq.s32.totalorder %s18, 7
      %p31 = por %p29, %p30
      %p32 = scmp.ne.s32.totalorder %s23, %s24
      %p33 = scmp.eq.s32.totalorder %s18, 0
      %p34 = por %p32, %p33
      %p35 = scmp.ne.s32.totalorder %s23, %s24
      %p36 = scmp.eq.s32.totalorder %s19, 7
      %p37 = por %p35, %p36
      %p39 = scmp.ne.s32.totalorder %s24, %s38
      %p40 = scmp.eq.s32.totalorder %s19, 0
      %p41 = por %p39, %p40
      %s43 = sadd.s32 %s42, 1
      %p46 = scmp.eq.s32.totalorder %s13, 7
      %p47 = scmp.ne.s32.totalorder %s42, %s44
      %p48 = scmp.eq.s32.totalorder %s13, 0
      %p49 = por %p47, %p48
      %p50 = scmp.ne.s32.totalorder %s42, %s44
      %p51 = scmp.eq.s32.totalorder %s18, 7
      %p52 = por %p50, %p51
      %p53 = scmp.ne.s32.totalorder %s44, %s45
      %p54 = scmp.eq.s32.totalorder %s18, 0
      %p55 = por %p53, %p54
      %p56 = scmp.ne.s32.totalorder %s44, %s45
      %p57 = scmp.eq.s32.totalorder %s19, 7
      %p58 = por %p56, %p57
      %p60 = scmp.ne.s32.totalorder %s45, %s59
      %p61 = scmp.eq.s32.totalorder %s19, 0
      %p62 = por %p60, %p61
      %s64 = sadd.s32 %s63, 1
      %p67 = scmp.eq.s32.totalorder %s13, 7
      %p68 = scmp.ne.s32.totalorder %s63, %s65
      %p69 = scmp.eq.s32.totalorder %s13, 0
      %p70 = por %p68, %p69
      %p71 = scmp.ne.s32.totalorder %s63, %s65
      %p72 = scmp.eq.s32.totalorder %s18, 7
      %p73 = por %p71, %p72
      %p74 = scmp.ne.s32.totalorder %s65, %s66
      %p75 = scmp.eq.s32.totalorder %s18, 0
      %p76 = por %p74, %p75
      %p77 = scmp.ne.s32.totalorder %s65, %s66
      %p78 = scmp.eq.s32.totalorder %s19, 7
      %p79 = por %p77, %p78
      %p81 = scmp.ne.s32.totalorder %s66, %s80
      %p82 = scmp.eq.s32.totalorder %s19, 0
      %p83 = por %p81, %p82
      %s84 = ssub.s32 %s13, %s20
      %p85 = scmp.eq.s32.totalorder %s84, 0
      %s87 = sadd.s32 %s86, 1
      %s88 = scalar_select %p85, %s86, %s87
      %p91 = pneg %p85
      %p92 = scmp.eq.s32.totalorder %s13, 7
      %p93 = por %p91, %p92
      %p94 = scmp.ne.s32.totalorder %s86, %s89
      %p95 = scmp.eq.s32.totalorder %s13, 0
      %p96 = por %p94, %p95
      %p97 = scmp.ne.s32.totalorder %s86, %s89
      %p98 = scmp.eq.s32.totalorder %s18, 7
      %p99 = por %p97, %p98
      %p100 = scmp.ne.s32.totalorder %s89, %s90
      %p101 = scmp.eq.s32.totalorder %s18, 0
      %p102 = por %p100, %p101
      %p103 = scmp.ne.s32.totalorder %s89, %s90
      %p104 = scmp.eq.s32.totalorder %s19, 7
      %p105 = por %p103, %p104
      %p107 = scmp.ne.s32.totalorder %s90, %s106
      %p108 = scmp.eq.s32.totalorder %s19, 0
      %p109 = por %p107, %p108
      %s110 = ssub.s32 %s13, %s20
      %p111 = scmp.eq.s32.totalorder %s110, 0
      %s113 = sadd.s32 %s112, 1
      %s114 = scalar_select %p111, %s112, %s113
      %p117 = pneg %p111
      %p118 = scmp.eq.s32.totalorder %s13, 7
      %p119 = por %p117, %p118
      %p120 = scmp.ne.s32.totalorder %s112, %s115
      %p121 = scmp.eq.s32.totalorder %s13, 0
      %p122 = por %p120, %p121
      %p123 = scmp.ne.s32.totalorder %s112, %s115
      %p124 = scmp.eq.s32.totalorder %s18, 7
      %p125 = por %p123, %p124
      %p126 = scmp.ne.s32.totalorder %s115, %s116
      %p127 = scmp.eq.s32.totalorder %s18, 0
      %p128 = por %p126, %p127
      %p129 = scmp.ne.s32.totalorder %s115, %s116
      %p130 = scmp.eq.s32.totalorder %s19, 7
      %p131 = por %p129, %p130
      %p133 = scmp.ne.s32.totalorder %s116, %s132
      %p134 = scmp.eq.s32.totalorder %s19, 0
      %p135 = por %p133, %p134
      %s136 = ssub.s32 %s13, %s20
      %p137 = scmp.eq.s32.totalorder %s136, 0
      %s139 = sadd.s32 %s138, 1
      %s140 = scalar_select %p137, %s138, %s139
      %p143 = pneg %p137
      %p144 = scmp.eq.s32.totalorder %s13, 7
      %p145 = por %p143, %p144
      %p146 = scmp.ne.s32.totalorder %s138, %s141
      %p147 = scmp.eq.s32.totalorder %s13, 0
      %p148 = por %p146, %p147
      %p149 = scmp.ne.s32.totalorder %s138, %s141
      %p150 = scmp.eq.s32.totalorder %s18, 7
      %p151 = por %p149, %p150
      %p152 = scmp.ne.s32.totalorder %s141, %s142
      %p153 = scmp.eq.s32.totalorder %s18, 0
      %p154 = por %p152, %p153
      %p155 = scmp.ne.s32.totalorder %s141, %s142
      %p156 = scmp.eq.s32.totalorder %s19, 7
      %p157 = por %p155, %p156
      %p159 = scmp.ne.s32.totalorder %s142, %s158
      %p160 = scmp.eq.s32.totalorder %s19, 0
      %p161 = por %p159, %p160
      %p162 = scmp.le.s32.totalorder 1, %s13
      %p163 = scmp.lt.s32.totalorder %s13, 9
      %p164 = pnand %p162, %p163
      %p165 = pneg %p164
      // Predicated region
      $region9: #{forward_visual.8} parent=5 // pred_check
        _
      $region10: #{forward_visual.8} parent=5 // pred_check_branch
        %167 = sbr.rel (%p164) target = $region12
      $region11: #{forward_visual.8} parent=5 // pred_region
        %s168 = ssub.s32 %s13, 1
        // Predicated region
        $region13: #{forward_visual.8} parent=11 // pred_check
          %p169 = pneg %p34
        $region14: #{forward_visual.8} parent=11 // pred_check_branch
          %171 = sbr.rel (%p169) target = $region16
        $region15: #{forward_visual.8} parent=11 // pred_region
          _
        $region16: #{forward_visual.8} parent=11 // pred_fallthru
          _
        // Predicated region
        $region17: #{forward_visual.8} parent=11 // pred_check
          %p172 = pneg %p55
        $region18: #{forward_visual.8} parent=11 // pred_check_branch
          %174 = sbr.rel (%p172) target = $region20
        $region19: #{forward_visual.8} parent=11 // pred_region
          %s176 = ssub.s32 16, 16
          %177 = vsyncadd [#allocation3], %s176
          %s179 = sshll.u32 [#allocation2], 4
          %s180 = int_to_ptr.vmem [resolvable:$true] %s179
          %182 = dma.hbm_to_vmem [thread:$0]  %s1, 16, %s180, [#allocation3]
        $region20: #{forward_visual.8} parent=11 // pred_fallthru
          _
        // Predicated region
        $region21: #{forward_visual.8} parent=11 // pred_check
          %p183 = pneg %p76
        $region22: #{forward_visual.8} parent=11 // pred_check_branch
          %185 = sbr.rel (%p183) target = $region24
        $region23: #{forward_visual.8} parent=11 // pred_region
          %s187 = ssub.s32 16, 16
          %188 = vsyncadd [#allocation5], %s187
          %s190 = sshll.u32 [#allocation4], 4
          %s191 = int_to_ptr.vmem [resolvable:$true] %s190
          %193 = dma.hbm_to_vmem [thread:$0]  %s2, 16, %s191, [#allocation5]
        $region24: #{forward_visual.8} parent=11 // pred_fallthru
          _
      $region12: #{forward_visual.8} parent=5 // pred_fallthru
        _
      %p194 = scmp.lt.s32.totalorder %s13, 8
      // Predicated region
      $region25: #{forward_visual.8} parent=5 // pred_check
        %p195 = pneg %p194
      $region26: #{forward_visual.8} parent=5 // pred_check_branch
        %197 = sbr.rel (%p195) target = $region28
      $region27: #{forward_visual.8} parent=5 // pred_region
        // Predicated region
        $region29: #{forward_visual.8} parent=27 // pred_check
          %p198 = pneg %p96
        $region30: #{forward_visual.8} parent=27 // pred_check_branch
          %200 = sbr.rel (%p198) target = $region32
        $region31: #{forward_visual.8} parent=27 // pred_region
          %s201 = sand.u32 %s13, 1
          %s202 = scalar_lea.sflag [#allocation3], %s201
          %s203 = sand.u32 %s86, 1
          %s204 = smul.addr %s203, 64
          %s205 = scalar_lea.vmem [#allocation6], %s204
          %s207 = ssub.s32 1024, 1024
          %208 = vsyncadd %s202, %s207
          %s209 = smul.addr %s13, 64
          %s210 = scalar_lea.hbm %s3, %s209
          %s211 = sshll.u32 %s205, 4
          %s212 = int_to_ptr.vmem [resolvable:$true] %s211
          %217 = dma.hbm_to_vmem [thread:$0]  %s210, 1024, %s212, %s202, 512, 64, 4
        $region32: #{forward_visual.8} parent=27 // pred_fallthru
          _
        // Predicated region
        $region33: #{forward_visual.8} parent=27 // pred_check
          %p218 = pneg %p122
        $region34: #{forward_visual.8} parent=27 // pred_check_branch
          %220 = sbr.rel (%p218) target = $region36
        $region35: #{forward_visual.8} parent=27 // pred_region
          %s221 = sand.u32 %s13, 1
          %s222 = scalar_lea.sflag [#allocation3], %s221
          %s223 = sand.u32 %s112, 1
          %s224 = scalar_lea.vmem [#allocation7], %s223
          %s226 = ssub.s32 16, 16
          %227 = vsyncadd %s222, %s226
          %s228 = smul.addr %s13, 16
          %s229 = scalar_lea.hbm %s4, %s228
          %s231 = sshll.u32 %s224, 4
          %s232 = int_to_ptr.vmem [resolvable:$true] %s231
          %234 = dma.hbm_to_vmem [thread:$0]  %s229, 16, %s232, %s222
        $region36: #{forward_visual.8} parent=27 // pred_fallthru
          _
      $region28: #{forward_visual.8} parent=5 // pred_fallthru
        _
      %p235 = scmp.le.s32.totalorder 1, %s13
      %p236 = scmp.lt.s32.totalorder %s13, 9
      %p237 = pnand %p235, %p236
      %p238 = pneg %p237
      // Predicated region
      $region37: #{forward_visual.8} parent=5 // pred_check
        _
      $region38: #{forward_visual.8} parent=5 // pred_check_branch
        %240 = sbr.rel (%p237) target = $region40
      $region39: #{forward_visual.8} parent=5 // pred_region
        %s241 = ssub.s32 %s13, 1
        // Predicated region
        $region41: #{forward_visual.8} parent=39 // pred_check
          %p242 = pneg %p55
        $region42: #{forward_visual.8} parent=39 // pred_check_branch
          %244 = sbr.rel (%p242) target = $region44
        $region43: #{forward_visual.8} parent=39 // pred_region
          %245 = dma.done [#allocation3], 16
        $region44: #{forward_visual.8} parent=39 // pred_fallthru
          _
        // Predicated region
        $region45: #{forward_visual.8} parent=39 // pred_check
          %p246 = pneg %p76
        $region46: #{forward_visual.8} parent=39 // pred_check_branch
          %248 = sbr.rel (%p246) target = $region48
        $region47: #{forward_visual.8} parent=39 // pred_region
          %249 = dma.done [#allocation5], 16
        $region48: #{forward_visual.8} parent=39 // pred_fallthru
          _
        %s250 = sand.u32 %s18, 1
        %s251 = scalar_lea.sflag [#allocation3], %s250
        %s252 = sand.u32 %s89, 1
        %s253 = smul.addr %s252, 64
        %s254 = scalar_lea.vmem [#allocation6], %s253
        // Predicated region
        $region49: #{forward_visual.8} parent=39 // pred_check
          %p255 = pneg %p102
        $region50: #{forward_visual.8} parent=39 // pred_check_branch
          %257 = sbr.rel (%p255) target = $region52
        $region51: #{forward_visual.8} parent=39 // pred_region
          %258 = dma.done %s251, 1024
        $region52: #{forward_visual.8} parent=39 // pred_fallthru
          _
        %s259 = sand.u32 %s18, 1
        %s260 = scalar_lea.sflag [#allocation3], %s259
        %s261 = sand.u32 %s115, 1
        %s262 = scalar_lea.vmem [#allocation7], %s261
        // Predicated region
        $region53: #{forward_visual.8} parent=39 // pred_check
          %p263 = pneg %p128
        $region54: #{forward_visual.8} parent=39 // pred_check_branch
          %265 = sbr.rel (%p263) target = $region56
        $region55: #{forward_visual.8} parent=39 // pred_region
          %266 = dma.done %s260, 16
        $region56: #{forward_visual.8} parent=39 // pred_fallthru
          _
        %p267 = pneg %p34
        %p268 = pneg %p31
        %p269 = pneg %p55
        %p270 = pneg %p52
        %p271 = pneg %p76
        %p272 = pneg %p73
        %s273 = sand.u32 %s18, 1
        %s274 = scalar_lea.sflag [#allocation3], %s273
        %s275 = sand.u32 %s89, 1
        %s276 = smul.addr %s275, 64
        %s277 = scalar_lea.vmem [#allocation6], %s276
        %p278 = pneg %p102
        %p279 = pneg %p99
        %s280 = sand.u32 %s18, 1
        %s281 = scalar_lea.sflag [#allocation3], %s280
        %s282 = sand.u32 %s115, 1
        %s283 = scalar_lea.vmem [#allocation7], %s282
        %p284 = pneg %p128
        %p285 = pneg %p125
        %p286 = pneg %p154
        %p287 = pneg %p151
        %p288 = scmp.lt.s32.totalorder %s18, 7
        %s289 = scalar_select %p288, %s18, 7
        %s290 = smul.addr %s289, 2
        %s291 = scalar_lea.vmem %s5, %s290
        %p292 = scmp.lt.s32.totalorder %s18, 7
        %s293 = scalar_select %p292, %s18, 7
        %s294 = smul.addr %s293, 2
        %s295 = scalar_lea.vmem %s5, %s294
        %v297 = vld [vmem:[%s0] sm:$0x3]
        %vm298 = vcmask 1041408
        %v299 = vsel %vm298, %v297, 0.0
        %300 = vadd.xlane.f32.xlu0 %v299
        %v301 = vpop.xlane.xlu0 %300
        %v302 = vrcp.pop 128.0
        %v303 = vmul.f32 %v301, %v302
        %v304 = vsub.f32 %v297, %v303
        %v305 = vmul.f32 %v304, %v304
        %v306 = vsel %vm298, %v305, 0.0
        %307 = vadd.xlane.f32.xlu0 %v306
        %v308 = vpop.xlane.xlu0 %307
        %v309 = vmul.f32 %v308, %v302
        %v310 = vadd.f32 %v309, 1e-05
        %v311 = vrsqrt.pop %v310
        %v312 = vmul.f32 %v304, %v311
        %v313 = vld [vmem:[#allocation2] sm:$0x1]
        %v315 = vlaneseq
        %v316 = vshrl.u32 %v315, 7
        %v317 = vsub.s32 0, %v316
        %v318 = vrot.slane %v313, %v317
        %v320 = vmul.f32 %v312, %v318
        %v321 = vld [vmem:[#allocation4] sm:$0x1]
        %v323 = vlaneseq
        %v324 = vshrl.u32 %v323, 7
        %v325 = vsub.s32 0, %v324
        %v326 = vrot.slane %v321, %v325
        %v328 = vadd.f32 %v320, %v326
        %v329 = vpack.c.bf16 %v328, %v328
        %v330 = vld [vmem:[%s254] sm:$0xf]
        %v331 = vld [vmem:[%s254 + $0x4] sm:$0xf]
        %v332 = vld [vmem:[%s254 + $0x8] sm:$0xf]
        %v333 = vld [vmem:[%s254 + $0xc] sm:$0xf]
        %v334 = vld [vmem:[%s254 + $0x10] sm:$0xf]
        %v335 = vld [vmem:[%s254 + $0x14] sm:$0xf]
        %v336 = vld [vmem:[%s254 + $0x18] sm:$0xf]
        %v337 = vld [vmem:[%s254 + $0x1c] sm:$0xf]
        %v338 = vld [vmem:[%s254 + $0x20] sm:$0xf]
        %v339 = vld [vmem:[%s254 + $0x24] sm:$0xf]
        %v340 = vld [vmem:[%s254 + $0x28] sm:$0xf]
        %v341 = vld [vmem:[%s254 + $0x2c] sm:$0xf]
        %v342 = vld [vmem:[%s254 + $0x30] sm:$0xf]
        %v343 = vld [vmem:[%s254 + $0x34] sm:$0xf]
        %v344 = vld [vmem:[%s254 + $0x38] sm:$0xf]
        %v345 = vld [vmem:[%s254 + $0x3c] sm:$0xf]
        %v346 = vld [vmem:[%s262] sm:$0x1]
        %v348 = vlaneseq
        %v349 = vshrl.u32 %v348, 7
        %v350 = vsub.s32 0, %v349
        %v351 = vrot.slane %v346, %v350
        %v369 = vunpack.c.l.b16 %v330
        %v370 = vunpack.c.l.b16 %v331
        %v371 = vunpack.c.l.b16 %v332
        %v372 = vunpack.c.l.b16 %v333
        %v373 = vunpack.c.l.b16 %v334
        %v374 = vunpack.c.l.b16 %v335
        %v375 = vunpack.c.l.b16 %v336
        %v376 = vunpack.c.l.b16 %v337
        %v377 = vunpack.c.l.b16 %v338
        %v378 = vunpack.c.l.b16 %v339
        %v379 = vunpack.c.l.b16 %v340
        %v380 = vunpack.c.l.b16 %v341
        %v381 = vunpack.c.l.b16 %v342
        %v382 = vunpack.c.l.b16 %v343
        %v383 = vunpack.c.l.b16 %v344
        %v384 = vunpack.c.l.b16 %v345
        %v385 = vpack.c.b16 %v370, %v369
        %v386 = vpack.c.b16 %v372, %v371
        %v387 = vpack.c.b16 %v374, %v373
        %v388 = vpack.c.b16 %v376, %v375
        %v389 = vpack.c.b16 %v378, %v377
        %v390 = vpack.c.b16 %v380, %v379
        %v391 = vpack.c.b16 %v382, %v381
        %v392 = vpack.c.b16 %v384, %v383
        %401 = vmatprep.subr.bf16.mxu0 0
        %402 = vmatpush1.bf16.msra.mxu0 %v392
        %403 = vmatprep.subr.bf16.mxu0 0
        %404 = vmatpush1.bf16.msra.mxu0 %v391
        %405 = vmatprep.subr.bf16.mxu0 0
        %406 = vmatpush1.bf16.msra.mxu0 %v390
        %407 = vmatprep.subr.bf16.mxu0 0
        %408 = vmatpush1.bf16.msra.mxu0 %v389
        %409 = vmatprep.subr.bf16.mxu0 0
        %410 = vmatpush1.bf16.msra.mxu0 %v388
        %411 = vmatprep.subr.bf16.mxu0 0
        %412 = vmatpush1.bf16.msra.mxu0 %v387
        %413 = vmatprep.subr.bf16.mxu0 0
        %414 = vmatpush1.bf16.msra.mxu0 %v386
        %415 = vmatprep.subr.bf16.mxu0 0
        %416 = vmatpush1.bf16.msra.mxu0 %v385
        %417 = vmatprep.subr.bf16.mxu0 0
        %418 = vmatpush2.bf16.msra.mxu0 0
        %419 = vmatprep.subr.bf16.mxu0 0
        %420 = vmatpush2.bf16.msra.mxu0 0
        %421 = vmatprep.subr.bf16.mxu0 0
        %422 = vmatpush2.bf16.msra.mxu0 0
        %423 = vmatprep.subr.bf16.mxu0 0
        %424 = vmatpush2.bf16.msra.mxu0 0
        %425 = vmatprep.subr.bf16.mxu0 0
        %426 = vmatpush2.bf16.msra.mxu0 0
        %427 = vmatprep.subr.bf16.mxu0 0
        %428 = vmatpush2.bf16.msra.mxu0 0
        %429 = vmatprep.subr.bf16.mxu0 0
        %430 = vmatpush2.bf16.msra.mxu0 0
        %431 = vmatprep.subr.bf16.mxu0 0
        %432 = vmatpush2.bf16.msra.mxu0 0
        %433 = vmatprep.mubr.bf16.mxu0 0
        %434 = vmatmul.mubr.bf16.gmra.mxu0 %v329
        %v435 = vpop.f32.mrf.mxu0
        %v436 = vadd.f32 %v351, %v435
        %v437 = vpop.f32.mrf.mxu0
        %v438 = vpop.f32.mrf.mxu0
        %v439 = vpop.f32.mrf.mxu0
        %440 = vdwg.mxu0
        %441 = vst [vmem:[%s295] sm:$0x3] %v436
        %p442 = scmp.lt.s32.totalorder %s18, 7
        %s443 = scalar_select %p442, %s18, 7
        %s444 = smul.addr %s443, 2
        %s445 = scalar_lea.vmem %s5, %s444
        // Predicated region
        $region57: #{forward_visual.8} parent=39 // pred_check
          %p446 = pneg %p151
        $region58: #{forward_visual.8} parent=39 // pred_check_branch
          %448 = sbr.rel (%p446) target = $region60
        $region59: #{forward_visual.8} parent=39 // pred_region
          _
        $region60: #{forward_visual.8} parent=39 // pred_fallthru
          _
      $region40: #{forward_visual.8} parent=5 // pred_fallthru
        _
      %p449 = scmp.le.s32.totalorder 2, %s13
      // Predicated region
      $region61: #{forward_visual.8} parent=5 // pred_check
        %p450 = pneg %p449
      $region62: #{forward_visual.8} parent=5 // pred_check_branch
        %452 = sbr.rel (%p450) target = $region64
      $region63: #{forward_visual.8} parent=5 // pred_region
        %s453 = ssub.s32 %s13, 2
        // Predicated region
        $region65: #{forward_visual.8} parent=63 // pred_check
          %p454 = pneg %p157
        $region66: #{forward_visual.8} parent=63 // pred_check_branch
          %456 = sbr.rel (%p454) target = $region68
        $region67: #{forward_visual.8} parent=63 // pred_region
          %p457 = scmp.lt.s32.totalorder %s19, 7
          %s458 = scalar_select %p457, %s19, 7
          %s459 = smul.addr %s458, 2
          %s460 = scalar_lea.vmem %s5, %s459
        $region68: #{forward_visual.8} parent=63 // pred_fallthru
          _
      $region64: #{forward_visual.8} parent=5 // pred_fallthru
        _
    $region6: #{forward_visual.8} parent=1 // loop_footer
      %s17 = sadd.s32 1, %s13
    $region7: #{forward_visual.8} parent=1 // loop_footer_branch
      %12 = sbr.rel target = $region3
    $region8: #{forward_visual.8} parent=1 // loop_exit
      _
    %461 = vsyncpa [#allocation3], 1
    %s462 = scalar_lea.sflag [#allocation3], 1
    %463 = vsyncpa %s462, 1
    %464 = vsyncpa [#allocation5], 1

// kernel: forward_visual.9
$region0: #{forward_visual.9}
  #allocation0 [shape = 'u32[]', space=smem, size = 0x4, offset = 0x4, fixed_abs, tag = 'smem constant byte address 0x4 - core index']
  #allocation1 [shape = 'u32[144,128]{1,0:T(1,128)}', space=vmem, size = 0x12000, scoped, tag = 'internal scratch']
  %s0 = inlined_call_operand.vmem [shape: f32[2,1024], index: 0, kind: input, shape index: {}]
  %s1 = inlined_call_operand.hbm [shape: bf16[512,128], index: 1, kind: input, shape index: {}]
  %s2 = inlined_call_operand.vmem [shape: f32[1,128], index: 2, kind: input, shape index: {}]
  %s3 = inlined_call_operand.vmem [shape: f32[2,128], index: 3, kind: output, shape index: {}]
  %s4 = sld [smem:[#allocation0]]
  $region26: #{forward_visual.9} parent=0
    _
  %s6 = ssub.s32 1, %s4
  %s7 = scalar_select 0, %s6, %s4
  $region1: #{forward_visual.9} parent=0
    #allocation2 [shape = 'u8[131072]{0}', space=vmem, size = 0x20000, scoped, tag = 'input window, operand 1, single buffered']
    #allocation3 [shape = 's32[1]{0}', space=sflag, size = 0x4, scoped, tag = 'scoped memory for forward_visual.9']
    %8 = vsyncpa [#allocation3], 0
    // Predicated region
    $region2: #{forward_visual.9} parent=1 // pred_check
      _
    $region3: #{forward_visual.9} parent=1 // pred_check_branch
      %10 = sbr.rel (0) target = $region5
    $region4: #{forward_visual.9} parent=1 // pred_region
      _
    $region5: #{forward_visual.9} parent=1 // pred_fallthru
      _
    // Predicated region
    $region6: #{forward_visual.9} parent=1 // pred_check
      _
    $region7: #{forward_visual.9} parent=1 // pred_check_branch
      %12 = sbr.rel (0) target = $region9
    $region8: #{forward_visual.9} parent=1 // pred_region
      %s14 = ssub.s32 4096, 4096
      %15 = vsyncadd [#allocation3], %s14
      %s16 = sshll.u32 [#allocation2], 4
      %s17 = int_to_ptr.vmem [resolvable:$true] %s16
      %22 = dma.hbm_to_vmem [thread:$0]  %s1, 4096, %s17, [#allocation3], 64, 64, 4
    $region9: #{forward_visual.9} parent=1 // pred_fallthru
      _
    // Predicated region
    $region10: #{forward_visual.9} parent=1 // pred_check
      _
    $region11: #{forward_visual.9} parent=1 // pred_check_branch
      %24 = sbr.rel (0) target = $region13
    $region12: #{forward_visual.9} parent=1 // pred_region
      _
    $region13: #{forward_visual.9} parent=1 // pred_fallthru
      _
    // Predicated region
    $region14: #{forward_visual.9} parent=1 // pred_check
      _
    $region15: #{forward_visual.9} parent=1 // pred_check_branch
      %26 = sbr.rel (0) target = $region17
    $region16: #{forward_visual.9} parent=1 // pred_region
      %27 = dma.done [#allocation3], 4096
    $region17: #{forward_visual.9} parent=1 // pred_fallthru
      _
    %v29 = vld [vmem:[%s0] sm:$0xff]
    %v30 = vld [vmem:[%s0 + $0x8] sm:$0xff]
    %v31 = vxor.u32 %v29, 2147483648
    %v32 = vmul.f32 %v31, 1.442695
    %v33 = vpow.pop %v32
    %v34 = vadd.f32 %v33, 1.0
    %v35 = vrcp.pop %v34
    %v36 = vmul.f32 1.0, %v35
    %v37 = vmul.f32 %v29, %v36
    %v38 = vmul.f32 %v37, %v30
    %v40 = vcombine.high %v38, %v38
    %v42 = vunpack.c.l.s4 1983009808
    %v43 = vunpack.c.0.s8 %v42
    %v44 = vlaneseq
    %v45 = vshrl.u32 %v44, 7
    %v46 = vsub.s32 %v43, %v45
    %v47 = vrot.slane %v38, %v46
    %v49 = vunpack.c.l.s4 1983009808
    %v50 = vunpack.c.0.s8 %v49
    %v51 = vlaneseq
    %v52 = vshrl.u32 %v51, 7
    %v53 = vsub.s32 %v50, %v52
    %v54 = vrot.slane %v40, %v53
    %v55 = vcombine.high %v47, %v47
    %v56 = vcombine.high %v54, %v54
    %v61 = vpack.c.bf16 %v47, %v47
    %v62 = vpack.c.bf16 %v55, %v55
    %v63 = vpack.c.bf16 %v54, %v54
    %v64 = vpack.c.bf16 %v56, %v56
    %v65 = vld [vmem:[#allocation2] sm:$0xf]
    %v66 = vld [vmem:[#allocation2 + $0x4] sm:$0xf]
    %v67 = vld [vmem:[#allocation2 + $0x8] sm:$0xf]
    %v68 = vld [vmem:[#allocation2 + $0xc] sm:$0xf]
    %v69 = vld [vmem:[#allocation2 + $0x10] sm:$0xf]
    %v70 = vld [vmem:[#allocation2 + $0x14] sm:$0xf]
    %v71 = vld [vmem:[#allocation2 + $0x18] sm:$0xf]
    %v72 = vld [vmem:[#allocation2 + $0x1c] sm:$0xf]
    %v73 = vld [vmem:[#allocation2 + $0x20] sm:$0xf]
    %v74 = vld [vmem:[#allocation2 + $0x24] sm:$0xf]
    %v75 = vld [vmem:[#allocation2 + $0x28] sm:$0xf]
    %v76 = vld [vmem:[#allocation2 + $0x2c] sm:$0xf]
    %v77 = vld [vmem:[#allocation2 + $0x30] sm:$0xf]
    %v78 = vld [vmem:[#allocation2 + $0x34] sm:$0xf]
    %v79 = vld [vmem:[#allocation2 + $0x38] sm:$0xf]
    %v80 = vld [vmem:[#allocation2 + $0x3c] sm:$0xf]
    %v81 = vld [vmem:[#allocation2 + $0x40] sm:$0xf]
    %v82 = vld [vmem:[#allocation2 + $0x44] sm:$0xf]
    %v83 = vld [vmem:[#allocation2 + $0x48] sm:$0xf]
    %v84 = vld [vmem:[#allocation2 + $0x4c] sm:$0xf]
    %v85 = vld [vmem:[#allocation2 + $0x50] sm:$0xf]
    %v86 = vld [vmem:[#allocation2 + $0x54] sm:$0xf]
    %v87 = vld [vmem:[#allocation2 + $0x58] sm:$0xf]
    %v88 = vld [vmem:[#allocation2 + $0x5c] sm:$0xf]
    %v89 = vld [vmem:[#allocation2 + $0x60] sm:$0xf]
    %v90 = vld [vmem:[#allocation2 + $0x64] sm:$0xf]
    %v91 = vld [vmem:[#allocation2 + $0x68] sm:$0xf]
    %v92 = vld [vmem:[#allocation2 + $0x6c] sm:$0xf]
    %v93 = vld [vmem:[#allocation2 + $0x70] sm:$0xf]
    %v94 = vld [vmem:[#allocation2 + $0x74] sm:$0xf]
    %v95 = vld [vmem:[#allocation2 + $0x78] sm:$0xf]
    %v96 = vld [vmem:[#allocation2 + $0x7c] sm:$0xf]
    %v97 = vld [vmem:[#allocation2 + $0x80] sm:$0xf]
    %v98 = vld [vmem:[#allocation2 + $0x84] sm:$0xf]
    %v99 = vld [vmem:[#allocation2 + $0x88] sm:$0xf]
    %v100 = vld [vmem:[#allocation2 + $0x8c] sm:$0xf]
    %v101 = vld [vmem:[#allocation2 + $0x90] sm:$0xf]
    %v102 = vld [vmem:[#allocation2 + $0x94] sm:$0xf]
    %v103 = vld [vmem:[#allocation2 + $0x98] sm:$0xf]
    %v104 = vld [vmem:[#allocation2 + $0x9c] sm:$0xf]
    %v105 = vld [vmem:[#allocation2 + $0xa0] sm:$0xf]
    %v106 = vld [vmem:[#allocation2 + $0xa4] sm:$0xf]
    %v107 = vld [vmem:[#allocation2 + $0xa8] sm:$0xf]
    %v108 = vld [vmem:[#allocation2 + $0xac] sm:$0xf]
    %v109 = vld [vmem:[#allocation2 + $0xb0] sm:$0xf]
    %v110 = vld [vmem:[#allocation2 + $0xb4] sm:$0xf]
    %v111 = vld [vmem:[#allocation2 + $0xb8] sm:$0xf]
    %v112 = vld [vmem:[#allocation2 + $0xbc] sm:$0xf]
    %v113 = vld [vmem:[#allocation2 + $0xc0] sm:$0xf]
    %v114 = vld [vmem:[#allocation2 + $0xc4] sm:$0xf]
    %v115 = vld [vmem:[#allocation2 + $0xc8] sm:$0xf]
    %v116 = vld [vmem:[#allocation2 + $0xcc] sm:$0xf]
    %v117 = vld [vmem:[#allocation2 + $0xd0] sm:$0xf]
    %v118 = vld [vmem:[#allocation2 + $0xd4] sm:$0xf]
    %v119 = vld [vmem:[#allocation2 + $0xd8] sm:$0xf]
    %v120 = vld [vmem:[#allocation2 + $0xdc] sm:$0xf]
    %v121 = vld [vmem:[#allocation2 + $0xe0] sm:$0xf]
    %v122 = vld [vmem:[#allocation2 + $0xe4] sm:$0xf]
    %v123 = vld [vmem:[#allocation2 + $0xe8] sm:$0xf]
    %v124 = vld [vmem:[#allocation2 + $0xec] sm:$0xf]
    %v125 = vld [vmem:[#allocation2 + $0xf0] sm:$0xf]
    %v126 = vld [vmem:[#allocation2 + $0xf4] sm:$0xf]
    %v127 = vld [vmem:[#allocation2 + $0xf8] sm:$0xf]
    %v128 = vld [vmem:[#allocation2 + $0xfc] sm:$0xf]
    %v129 = vld [vmem:[%s2] sm:$0x1]
    %v131 = vlaneseq
    %v132 = vshrl.u32 %v131, 7
    %v133 = vsub.s32 0, %v132
    %v134 = vrot.slane %v129, %v133
    %v200 = vunpack.c.l.b16 %v65
    %v201 = vunpack.c.l.b16 %v66
    %v202 = vunpack.c.l.b16 %v67
    %v203 = vunpack.c.l.b16 %v68
    %v204 = vunpack.c.l.b16 %v69
    %v205 = vunpack.c.l.b16 %v70
    %v206 = vunpack.c.l.b16 %v71
    %v207 = vunpack.c.l.b16 %v72
    %v208 = vunpack.c.l.b16 %v73
    %v209 = vunpack.c.l.b16 %v74
    %v210 = vunpack.c.l.b16 %v75
    %v211 = vunpack.c.l.b16 %v76
    %v212 = vunpack.c.l.b16 %v77
    %v213 = vunpack.c.l.b16 %v78
    %v214 = vunpack.c.l.b16 %v79
    %v215 = vunpack.c.l.b16 %v80
    %v216 = vunpack.c.l.b16 %v81
    %v217 = vunpack.c.l.b16 %v82
    %v218 = vunpack.c.l.b16 %v83
    %v219 = vunpack.c.l.b16 %v84
    %v220 = vunpack.c.l.b16 %v85
    %v221 = vunpack.c.l.b16 %v86
    %v222 = vunpack.c.l.b16 %v87
    %v223 = vunpack.c.l.b16 %v88
    %v224 = vunpack.c.l.b16 %v89
    %v225 = vunpack.c.l.b16 %v90
    %v226 = vunpack.c.l.b16 %v91
    %v227 = vunpack.c.l.b16 %v92
    %v228 = vunpack.c.l.b16 %v93
    %v229 = vunpack.c.l.b16 %v94
    %v230 = vunpack.c.l.b16 %v95
    %v231 = vunpack.c.l.b16 %v96
    %v232 = vunpack.c.l.b16 %v97
    %v233 = vunpack.c.l.b16 %v98
    %v234 = vunpack.c.l.b16 %v99
    %v235 = vunpack.c.l.b16 %v100
    %v236 = vunpack.c.l.b16 %v101
    %v237 = vunpack.c.l.b16 %v102
    %v238 = vunpack.c.l.b16 %v103
    %v239 = vunpack.c.l.b16 %v104
    %v240 = vunpack.c.l.b16 %v105
    %v241 = vunpack.c.l.b16 %v106
    %v242 = vunpack.c.l.b16 %v107
    %v243 = vunpack.c.l.b16 %v108
    %v244 = vunpack.c.l.b16 %v109
    %v245 = vunpack.c.l.b16 %v110
    %v246 = vunpack.c.l.b16 %v111
    %v247 = vunpack.c.l.b16 %v112
    %v248 = vunpack.c.l.b16 %v113
    %v249 = vunpack.c.l.b16 %v114
    %v250 = vunpack.c.l.b16 %v115
    %v251 = vunpack.c.l.b16 %v116
    %v252 = vunpack.c.l.b16 %v117
    %v253 = vunpack.c.l.b16 %v118
    %v254 = vunpack.c.l.b16 %v119
    %v255 = vunpack.c.l.b16 %v120
    %v256 = vunpack.c.l.b16 %v121
    %v257 = vunpack.c.l.b16 %v122
    %v258 = vunpack.c.l.b16 %v123
    %v259 = vunpack.c.l.b16 %v124
    %v260 = vunpack.c.l.b16 %v125
    %v261 = vunpack.c.l.b16 %v126
    %v262 = vunpack.c.l.b16 %v127
    %v263 = vunpack.c.l.b16 %v128
    %v264 = vpack.c.b16 %v201, %v200
    %v265 = vpack.c.b16 %v203, %v202
    %v266 = vpack.c.b16 %v205, %v204
    %v267 = vpack.c.b16 %v207, %v206
    %v268 = vpack.c.b16 %v209, %v208
    %v269 = vpack.c.b16 %v211, %v210
    %v270 = vpack.c.b16 %v213, %v212
    %v271 = vpack.c.b16 %v215, %v214
    %v272 = vpack.c.b16 %v217, %v216
    %v273 = vpack.c.b16 %v219, %v218
    %v274 = vpack.c.b16 %v221, %v220
    %v275 = vpack.c.b16 %v223, %v222
    %v276 = vpack.c.b16 %v225, %v224
    %v277 = vpack.c.b16 %v227, %v226
    %v278 = vpack.c.b16 %v229, %v228
    %v279 = vpack.c.b16 %v231, %v230
    %v280 = vpack.c.b16 %v233, %v232
    %v281 = vpack.c.b16 %v235, %v234
    %v282 = vpack.c.b16 %v237, %v236
    %v283 = vpack.c.b16 %v239, %v238
    %v284 = vpack.c.b16 %v241, %v240
    %v285 = vpack.c.b16 %v243, %v242
    %v286 = vpack.c.b16 %v245, %v244
    %v287 = vpack.c.b16 %v247, %v246
    %v288 = vpack.c.b16 %v249, %v248
    %v289 = vpack.c.b16 %v251, %v250
    %v290 = vpack.c.b16 %v253, %v252
    %v291 = vpack.c.b16 %v255, %v254
    %v292 = vpack.c.b16 %v257, %v256
    %v293 = vpack.c.b16 %v259, %v258
    %v294 = vpack.c.b16 %v261, %v260
    %v295 = vpack.c.b16 %v263, %v262
    %328 = vmatprep.subr.bf16.mxu0 0
    %329 = vmatpush1.bf16.msra.mxu0 %v271
    %330 = vmatprep.subr.bf16.mxu0 0
    %331 = vmatpush1.bf16.msra.mxu0 %v270
    %332 = vmatprep.subr.bf16.mxu0 0
    %333 = vmatpush1.bf16.msra.mxu0 %v269
    %334 = vmatprep.subr.bf16.mxu0 0
    %335 = vmatpush1.bf16.msra.mxu0 %v268
    %336 = vmatprep.subr.bf16.mxu0 0
    %337 = vmatpush1.bf16.msra.mxu0 %v267
    %338 = vmatprep.subr.bf16.mxu0 0
    %339 = vmatpush1.bf16.msra.mxu0 %v266
    %340 = vmatprep.subr.bf16.mxu0 0
    %341 = vmatpush1.bf16.msra.mxu0 %v265
    %342 = vmatprep.subr.bf16.mxu0 0
    %343 = vmatpush1.bf16.msra.mxu0 %v264
    %344 = vmatprep.subr.bf16.mxu0 0
    %345 = vmatpush2.bf16.msra.mxu0 %v279
    %346 = vmatprep.subr.bf16.mxu0 0
    %347 = vmatpush2.bf16.msra.mxu0 %v278
    %348 = vmatprep.subr.bf16.mxu0 0
    %349 = vmatpush2.bf16.msra.mxu0 %v277
    %350 = vmatprep.subr.bf16.mxu0 0
    %351 = vmatpush2.bf16.msra.mxu0 %v276
    %352 = vmatprep.subr.bf16.mxu0 0
    %353 = vmatpush2.bf16.msra.mxu0 %v275
    %354 = vmatprep.subr.bf16.mxu0 0
    %355 = vmatpush2.bf16.msra.mxu0 %v274
    %356 = vmatprep.subr.bf16.mxu0 0
    %357 = vmatpush2.bf16.msra.mxu0 %v273
    %358 = vmatprep.subr.bf16.mxu0 0
    %359 = vmatpush2.bf16.msra.mxu0 %v272
    %360 = vmatprep.mubr.bf16.mxu0 %v62
    %361 = vmatmul.mubr.bf16.gmra.mxu0 %v61
    %v362 = vpop.f32.mrf.mxu0
    %v363 = vadd.f32 %v134, %v362
    %v364 = vpop.f32.mrf.mxu0
    %v365 = vpop.f32.mrf.mxu0
    %v366 = vpop.f32.mrf.mxu0
    %367 = vdwg.mxu0
    %368 = vmatprep.subr.bf16.mxu0 0
    %369 = vmatpush1.bf16.msra.mxu0 %v287
    %370 = vmatprep.subr.bf16.mxu0 0
    %371 = vmatpush1.bf16.msra.mxu0 %v286
    %372 = vmatprep.subr.bf16.mxu0 0
    %373 = vmatpush1.bf16.msra.mxu0 %v285
    %374 = vmatprep.subr.bf16.mxu0 0
    %375 = vmatpush1.bf16.msra.mxu0 %v284
    %376 = vmatprep.subr.bf16.mxu0 0
    %377 = vmatpush1.bf16.msra.mxu0 %v283
    %378 = vmatprep.subr.bf16.mxu0 0
    %379 = vmatpush1.bf16.msra.mxu0 %v282
    %380 = vmatprep.subr.bf16.mxu0 0
    %381 = vmatpush1.bf16.msra.mxu0 %v281
    %382 = vmatprep.subr.bf16.mxu0 0
    %383 = vmatpush1.bf16.msra.mxu0 %v280
    %384 = vmatprep.subr.bf16.mxu0 0
    %385 = vmatpush2.bf16.msra.mxu0 %v295
    %386 = vmatprep.subr.bf16.mxu0 0
    %387 = vmatpush2.bf16.msra.mxu0 %v294
    %388 = vmatprep.subr.bf16.mxu0 0
    %389 = vmatpush2.bf16.msra.mxu0 %v293
    %390 = vmatprep.subr.bf16.mxu0 0
    %391 = vmatpush2.bf16.msra.mxu0 %v292
    %392 = vmatprep.subr.bf16.mxu0 0
    %393 = vmatpush2.bf16.msra.mxu0 %v291
    %394 = vmatprep.subr.bf16.mxu0 0
    %395 = vmatpush2.bf16.msra.mxu0 %v290
    %396 = vmatprep.subr.bf16.mxu0 0
    %397 = vmatpush2.bf16.msra.mxu0 %v289
    %398 = vmatprep.subr.bf16.mxu0 0
    %399 = vmatpush2.bf16.msra.mxu0 %v288
    %400 = vmatprep.mubr.bf16.mxu0 %v64
    %401 = vmatmul.mubr.bf16.gmra.mxu0 %v63
    %v402 = vpop.f32.mrf.mxu0
    %v403 = vadd.f32 %v363, %v402
    %v404 = vpop.f32.mrf.mxu0
    %v405 = vpop.f32.mrf.mxu0
    %v406 = vpop.f32.mrf.mxu0
    %407 = vdwg.mxu0
    %408 = vst [vmem:[%s3] sm:$0x3] %v403
    // Predicated region
    $region18: #{forward_visual.9} parent=1 // pred_check
      _
    $region19: #{forward_visual.9} parent=1 // pred_check_branch
      %410 = sbr.rel (0) target = $region21
    $region20: #{forward_visual.9} parent=1 // pred_region
      _
    $region21: #{forward_visual.9} parent=1 // pred_fallthru
      _
    // Predicated region
    $region22: #{forward_visual.9} parent=1 // pred_check
      _
    $region23: #{forward_visual.9} parent=1 // pred_check_branch
      %412 = sbr.rel (0) target = $region25
    $region24: #{forward_visual.9} parent=1 // pred_region
      _
    $region25: #{forward_visual.9} parent=1 // pred_fallthru
      _
    %413 = vsyncpa [#allocation3], 1

// kernel: forward_visual.11
$region0: #{forward_visual.11}
  #allocation0 [shape = 'u32[]', space=smem, size = 0x4, offset = 0x4, fixed_abs, tag = 'smem constant byte address 0x4 - core index']
  #allocation1 [shape = 'u32[144,128]{1,0:T(1,128)}', space=vmem, size = 0x12000, scoped, tag = 'internal scratch']
  %s0 = inlined_call_operand.vmem [shape: f32[2,1024], index: 0, kind: input, shape index: {}]
  %s1 = inlined_call_operand.vmem [shape: bf16[512,128], index: 1, kind: input, shape index: {}]
  %s2 = inlined_call_operand.vmem [shape: f32[1,128], index: 2, kind: input, shape index: {}]
  %s3 = inlined_call_operand.vmem [shape: f32[2,128], index: 3, kind: output, shape index: {}]
  %s4 = sld [smem:[#allocation0]]
  $region22: #{forward_visual.11} parent=0
    _
  %s6 = ssub.s32 1, %s4
  %s7 = scalar_select 0, %s6, %s4
  // Predicated region
  $region2: #{forward_visual.11} parent=0 // pred_check
    _
  $region3: #{forward_visual.11} parent=0 // pred_check_branch
    %9 = sbr.rel (0) target = $region5
  $region4: #{forward_visual.11} parent=0 // pred_region
    _
  $region5: #{forward_visual.11} parent=0 // pred_fallthru
    _
  // Predicated region
  $region6: #{forward_visual.11} parent=0 // pred_check
    _
  $region7: #{forward_visual.11} parent=0 // pred_check_branch
    %11 = sbr.rel (0) target = $region9
  $region8: #{forward_visual.11} parent=0 // pred_region
    _
  $region9: #{forward_visual.11} parent=0 // pred_fallthru
    _
  // Predicated region
  $region10: #{forward_visual.11} parent=0 // pred_check
    _
  $region11: #{forward_visual.11} parent=0 // pred_check_branch
    %13 = sbr.rel (0) target = $region13
  $region12: #{forward_visual.11} parent=0 // pred_region
    _
  $region13: #{forward_visual.11} parent=0 // pred_fallthru
    _
  %v15 = vld [vmem:[%s0] sm:$0xff]
  %v16 = vld [vmem:[%s0 + $0x8] sm:$0xff]
  %v17 = vxor.u32 %v15, 2147483648
  %v18 = vmul.f32 %v17, 1.442695
  %v19 = vpow.pop %v18
  %v20 = vadd.f32 %v19, 1.0
  %v21 = vrcp.pop %v20
  %v22 = vmul.f32 1.0, %v21
  %v23 = vmul.f32 %v15, %v22
  %v24 = vmul.f32 %v23, %v16
  %v26 = vcombine.high %v24, %v24
  %v28 = vunpack.c.l.s4 1983009808
  %v29 = vunpack.c.0.s8 %v28
  %v30 = vlaneseq
  %v31 = vshrl.u32 %v30, 7
  %v32 = vsub.s32 %v29, %v31
  %v33 = vrot.slane %v24, %v32
  %v35 = vunpack.c.l.s4 1983009808
  %v36 = vunpack.c.0.s8 %v35
  %v37 = vlaneseq
  %v38 = vshrl.u32 %v37, 7
  %v39 = vsub.s32 %v36, %v38
  %v40 = vrot.slane %v26, %v39
  %v41 = vcombine.high %v33, %v33
  %v42 = vcombine.high %v40, %v40
  %v47 = vpack.c.bf16 %v33, %v33
  %v48 = vpack.c.bf16 %v41, %v41
  %v49 = vpack.c.bf16 %v40, %v40
  %v50 = vpack.c.bf16 %v42, %v42
  %v51 = vld [vmem:[%s1] sm:$0xf]
  %v52 = vld [vmem:[%s1 + $0x4] sm:$0xf]
  %v53 = vld [vmem:[%s1 + $0x8] sm:$0xf]
  %v54 = vld [vmem:[%s1 + $0xc] sm:$0xf]
  %v55 = vld [vmem:[%s1 + $0x10] sm:$0xf]
  %v56 = vld [vmem:[%s1 + $0x14] sm:$0xf]
  %v57 = vld [vmem:[%s1 + $0x18] sm:$0xf]
  %v58 = vld [vmem:[%s1 + $0x1c] sm:$0xf]
  %v59 = vld [vmem:[%s1 + $0x20] sm:$0xf]
  %v60 = vld [vmem:[%s1 + $0x24] sm:$0xf]
  %v61 = vld [vmem:[%s1 + $0x28] sm:$0xf]
  %v62 = vld [vmem:[%s1 + $0x2c] sm:$0xf]
  %v63 = vld [vmem:[%s1 + $0x30] sm:$0xf]
  %v64 = vld [vmem:[%s1 + $0x34] sm:$0xf]
  %v65 = vld [vmem:[%s1 + $0x38] sm:$0xf]
  %v66 = vld [vmem:[%s1 + $0x3c] sm:$0xf]
  %v67 = vld [vmem:[%s1 + $0x40] sm:$0xf]
  %v68 = vld [vmem:[%s1 + $0x44] sm:$0xf]
  %v69 = vld [vmem:[%s1 + $0x48] sm:$0xf]
  %v70 = vld [vmem:[%s1 + $0x4c] sm:$0xf]
  %v71 = vld [vmem:[%s1 + $0x50] sm:$0xf]
  %v72 = vld [vmem:[%s1 + $0x54] sm:$0xf]
  %v73 = vld [vmem:[%s1 + $0x58] sm:$0xf]
  %v74 = vld [vmem:[%s1 + $0x5c] sm:$0xf]
  %v75 = vld [vmem:[%s1 + $0x60] sm:$0xf]
  %v76 = vld [vmem:[%s1 + $0x64] sm:$0xf]
  %v77 = vld [vmem:[%s1 + $0x68] sm:$0xf]
  %v78 = vld [vmem:[%s1 + $0x6c] sm:$0xf]
  %v79 = vld [vmem:[%s1 + $0x70] sm:$0xf]
  %v80 = vld [vmem:[%s1 + $0x74] sm:$0xf]
  %v81 = vld [vmem:[%s1 + $0x78] sm:$0xf]
  %v82 = vld [vmem:[%s1 + $0x7c] sm:$0xf]
  %v83 = vld [vmem:[%s1 + $0x80] sm:$0xf]
  %v84 = vld [vmem:[%s1 + $0x84] sm:$0xf]
  %v85 = vld [vmem:[%s1 + $0x88] sm:$0xf]
  %v86 = vld [vmem:[%s1 + $0x8c] sm:$0xf]
  %v87 = vld [vmem:[%s1 + $0x90] sm:$0xf]
  %v88 = vld [vmem:[%s1 + $0x94] sm:$0xf]
  %v89 = vld [vmem:[%s1 + $0x98] sm:$0xf]
  %v90 = vld [vmem:[%s1 + $0x9c] sm:$0xf]
  %v91 = vld [vmem:[%s1 + $0xa0] sm:$0xf]
  %v92 = vld [vmem:[%s1 + $0xa4] sm:$0xf]
  %v93 = vld [vmem:[%s1 + $0xa8] sm:$0xf]
  %v94 = vld [vmem:[%s1 + $0xac] sm:$0xf]
  %v95 = vld [vmem:[%s1 + $0xb0] sm:$0xf]
  %v96 = vld [vmem:[%s1 + $0xb4] sm:$0xf]
  %v97 = vld [vmem:[%s1 + $0xb8] sm:$0xf]
  %v98 = vld [vmem:[%s1 + $0xbc] sm:$0xf]
  %v99 = vld [vmem:[%s1 + $0xc0] sm:$0xf]
  %v100 = vld [vmem:[%s1 + $0xc4] sm:$0xf]
  %v101 = vld [vmem:[%s1 + $0xc8] sm:$0xf]
  %v102 = vld [vmem:[%s1 + $0xcc] sm:$0xf]
  %v103 = vld [vmem:[%s1 + $0xd0] sm:$0xf]
  %v104 = vld [vmem:[%s1 + $0xd4] sm:$0xf]
  %v105 = vld [vmem:[%s1 + $0xd8] sm:$0xf]
  %v106 = vld [vmem:[%s1 + $0xdc] sm:$0xf]
  %v107 = vld [vmem:[%s1 + $0xe0] sm:$0xf]
  %v108 = vld [vmem:[%s1 + $0xe4] sm:$0xf]
  %v109 = vld [vmem:[%s1 + $0xe8] sm:$0xf]
  %v110 = vld [vmem:[%s1 + $0xec] sm:$0xf]
  %v111 = vld [vmem:[%s1 + $0xf0] sm:$0xf]
  %v112 = vld [vmem:[%s1 + $0xf4] sm:$0xf]
  %v113 = vld [vmem:[%s1 + $0xf8] sm:$0xf]
  %v114 = vld [vmem:[%s1 + $0xfc] sm:$0xf]
  %v115 = vld [vmem:[%s2] sm:$0x1]
  %v117 = vlaneseq
  %v118 = vshrl.u32 %v117, 7
  %v119 = vsub.s32 0, %v118
  %v120 = vrot.slane %v115, %v119
  %v186 = vunpack.c.l.b16 %v51
  %v187 = vunpack.c.l.b16 %v52
  %v188 = vunpack.c.l.b16 %v53
  %v189 = vunpack.c.l.b16 %v54
  %v190 = vunpack.c.l.b16 %v55
  %v191 = vunpack.c.l.b16 %v56
  %v192 = vunpack.c.l.b16 %v57
  %v193 = vunpack.c.l.b16 %v58
  %v194 = vunpack.c.l.b16 %v59
  %v195 = vunpack.c.l.b16 %v60
  %v196 = vunpack.c.l.b16 %v61
  %v197 = vunpack.c.l.b16 %v62
  %v198 = vunpack.c.l.b16 %v63
  %v199 = vunpack.c.l.b16 %v64
  %v200 = vunpack.c.l.b16 %v65
  %v201 = vunpack.c.l.b16 %v66
  %v202 = vunpack.c.l.b16 %v67
  %v203 = vunpack.c.l.b16 %v68
  %v204 = vunpack.c.l.b16 %v69
  %v205 = vunpack.c.l.b16 %v70
  %v206 = vunpack.c.l.b16 %v71
  %v207 = vunpack.c.l.b16 %v72
  %v208 = vunpack.c.l.b16 %v73
  %v209 = vunpack.c.l.b16 %v74
  %v210 = vunpack.c.l.b16 %v75
  %v211 = vunpack.c.l.b16 %v76
  %v212 = vunpack.c.l.b16 %v77
  %v213 = vunpack.c.l.b16 %v78
  %v214 = vunpack.c.l.b16 %v79
  %v215 = vunpack.c.l.b16 %v80
  %v216 = vunpack.c.l.b16 %v81
  %v217 = vunpack.c.l.b16 %v82
  %v218 = vunpack.c.l.b16 %v83
  %v219 = vunpack.c.l.b16 %v84
  %v220 = vunpack.c.l.b16 %v85
  %v221 = vunpack.c.l.b16 %v86
  %v222 = vunpack.c.l.b16 %v87
  %v223 = vunpack.c.l.b16 %v88
  %v224 = vunpack.c.l.b16 %v89
  %v225 = vunpack.c.l.b16 %v90
  %v226 = vunpack.c.l.b16 %v91
  %v227 = vunpack.c.l.b16 %v92
  %v228 = vunpack.c.l.b16 %v93
  %v229 = vunpack.c.l.b16 %v94
  %v230 = vunpack.c.l.b16 %v95
  %v231 = vunpack.c.l.b16 %v96
  %v232 = vunpack.c.l.b16 %v97
  %v233 = vunpack.c.l.b16 %v98
  %v234 = vunpack.c.l.b16 %v99
  %v235 = vunpack.c.l.b16 %v100
  %v236 = vunpack.c.l.b16 %v101
  %v237 = vunpack.c.l.b16 %v102
  %v238 = vunpack.c.l.b16 %v103
  %v239 = vunpack.c.l.b16 %v104
  %v240 = vunpack.c.l.b16 %v105
  %v241 = vunpack.c.l.b16 %v106
  %v242 = vunpack.c.l.b16 %v107
  %v243 = vunpack.c.l.b16 %v108
  %v244 = vunpack.c.l.b16 %v109
  %v245 = vunpack.c.l.b16 %v110
  %v246 = vunpack.c.l.b16 %v111
  %v247 = vunpack.c.l.b16 %v112
  %v248 = vunpack.c.l.b16 %v113
  %v249 = vunpack.c.l.b16 %v114
  %v250 = vpack.c.b16 %v187, %v186
  %v251 = vpack.c.b16 %v189, %v188
  %v252 = vpack.c.b16 %v191, %v190
  %v253 = vpack.c.b16 %v193, %v192
  %v254 = vpack.c.b16 %v195, %v194
  %v255 = vpack.c.b16 %v197, %v196
  %v256 = vpack.c.b16 %v199, %v198
  %v257 = vpack.c.b16 %v201, %v200
  %v258 = vpack.c.b16 %v203, %v202
  %v259 = vpack.c.b16 %v205, %v204
  %v260 = vpack.c.b16 %v207, %v206
  %v261 = vpack.c.b16 %v209, %v208
  %v262 = vpack.c.b16 %v211, %v210
  %v263 = vpack.c.b16 %v213, %v212
  %v264 = vpack.c.b16 %v215, %v214
  %v265 = vpack.c.b16 %v217, %v216
  %v266 = vpack.c.b16 %v219, %v218
  %v267 = vpack.c.b16 %v221, %v220
  %v268 = vpack.c.b16 %v223, %v222
  %v269 = vpack.c.b16 %v225, %v224
  %v270 = vpack.c.b16 %v227, %v226
  %v271 = vpack.c.b16 %v229, %v228
  %v272 = vpack.c.b16 %v231, %v230
  %v273 = vpack.c.b16 %v233, %v232
  %v274 = vpack.c.b16 %v235, %v234
  %v275 = vpack.c.b16 %v237, %v236
  %v276 = vpack.c.b16 %v239, %v238
  %v277 = vpack.c.b16 %v241, %v240
  %v278 = vpack.c.b16 %v243, %v242
  %v279 = vpack.c.b16 %v245, %v244
  %v280 = vpack.c.b16 %v247, %v246
  %v281 = vpack.c.b16 %v249, %v248
  %314 = vmatprep.subr.bf16.mxu0 0
  %315 = vmatpush1.bf16.msra.mxu0 %v257
  %316 = vmatprep.subr.bf16.mxu0 0
  %317 = vmatpush1.bf16.msra.mxu0 %v256
  %318 = vmatprep.subr.bf16.mxu0 0
  %319 = vmatpush1.bf16.msra.mxu0 %v255
  %320 = vmatprep.subr.bf16.mxu0 0
  %321 = vmatpush1.bf16.msra.mxu0 %v254
  %322 = vmatprep.subr.bf16.mxu0 0
  %323 = vmatpush1.bf16.msra.mxu0 %v253
  %324 = vmatprep.subr.bf16.mxu0 0
  %325 = vmatpush1.bf16.msra.mxu0 %v252
  %326 = vmatprep.subr.bf16.mxu0 0
  %327 = vmatpush1.bf16.msra.mxu0 %v251
  %328 = vmatprep.subr.bf16.mxu0 0
  %329 = vmatpush1.bf16.msra.mxu0 %v250
  %330 = vmatprep.subr.bf16.mxu0 0
  %331 = vmatpush2.bf16.msra.mxu0 %v265
  %332 = vmatprep.subr.bf16.mxu0 0
  %333 = vmatpush2.bf16.msra.mxu0 %v264
  %334 = vmatprep.subr.bf16.mxu0 0
  %335 = vmatpush2.bf16.msra.mxu0 %v263
  %336 = vmatprep.subr.bf16.mxu0 0
  %337 = vmatpush2.bf16.msra.mxu0 %v262
  %338 = vmatprep.subr.bf16.mxu0 0
  %339 = vmatpush2.bf16.msra.mxu0 %v261
  %340 = vmatprep.subr.bf16.mxu0 0
  %341 = vmatpush2.bf16.msra.mxu0 %v260
  %342 = vmatprep.subr.bf16.mxu0 0
  %343 = vmatpush2.bf16.msra.mxu0 %v259
  %344 = vmatprep.subr.bf16.mxu0 0
  %345 = vmatpush2.bf16.msra.mxu0 %v258
  %346 = vmatprep.mubr.bf16.mxu0 %v48
  %347 = vmatmul.mubr.bf16.gmra.mxu0 %v47
  %v348 = vpop.f32.mrf.mxu0
  %v349 = vadd.f32 %v120, %v348
  %v350 = vpop.f32.mrf.mxu0
  %v351 = vpop.f32.mrf.mxu0
  %v352 = vpop.f32.mrf.mxu0
  %353 = vdwg.mxu0
  %354 = vmatprep.subr.bf16.mxu0 0
  %355 = vmatpush1.bf16.msra.mxu0 %v273
  %356 = vmatprep.subr.bf16.mxu0 0
  %357 = vmatpush1.bf16.msra.mxu0 %v272
  %358 = vmatprep.subr.bf16.mxu0 0
  %359 = vmatpush1.bf16.msra.mxu0 %v271
  %360 = vmatprep.subr.bf16.mxu0 0
  %361 = vmatpush1.bf16.msra.mxu0 %v270
  %362 = vmatprep.subr.bf16.mxu0 0
  %363 = vmatpush1.bf16.msra.mxu0 %v269
  %364 = vmatprep.subr.bf16.mxu0 0
  %365 = vmatpush1.bf16.msra.mxu0 %v268
  %366 = vmatprep.subr.bf16.mxu0 0
  %367 = vmatpush1.bf16.msra.mxu0 %v267
  %368 = vmatprep.subr.bf16.mxu0 0
  %369 = vmatpush1.bf16.msra.mxu0 %v266
  %370 = vmatprep.subr.bf16.mxu0 0
  %371 = vmatpush2.bf16.msra.mxu0 %v281
  %372 = vmatprep.subr.bf16.mxu0 0
  %373 = vmatpush2.bf16.msra.mxu0 %v280
  %374 = vmatprep.subr.bf16.mxu0 0
  %375 = vmatpush2.bf16.msra.mxu0 %v279
  %376 = vmatprep.subr.bf16.mxu0 0
  %377 = vmatpush2.bf16.msra.mxu0 %v278
  %378 = vmatprep.subr.bf16.mxu0 0
  %379 = vmatpush2.bf16.msra.mxu0 %v277
  %380 = vmatprep.subr.bf16.mxu0 0
  %381 = vmatpush2.bf16.msra.mxu0 %v276
  %382 = vmatprep.subr.bf16.mxu0 0
  %383 = vmatpush2.bf16.msra.mxu0 %v275
  %384 = vmatprep.subr.bf16.mxu0 0
  %385 = vmatpush2.bf16.msra.mxu0 %v274
  %386 = vmatprep.mubr.bf16.mxu0 %v50
  %387 = vmatmul.mubr.bf16.gmra.mxu0 %v49
  %v388 = vpop.f32.mrf.mxu0
  %v389 = vadd.f32 %v349, %v388
  %v390 = vpop.f32.mrf.mxu0
  %v391 = vpop.f32.mrf.mxu0
  %v392 = vpop.f32.mrf.mxu0
  %393 = vdwg.mxu0
  %394 = vst [vmem:[%s3] sm:$0x3] %v389
  // Predicated region
  $region14: #{forward_visual.11} parent=0 // pred_check
    _
  $region15: #{forward_visual.11} parent=0 // pred_check_branch
    %396 = sbr.rel (0) target = $region17
  $region16: #{forward_visual.11} parent=0 // pred_region
    _
  $region17: #{forward_visual.11} parent=0 // pred_fallthru
    _
  // Predicated region
  $region18: #{forward_visual.11} parent=0 // pred_check
    _
  $region19: #{forward_visual.11} parent=0 // pred_check_branch
    %398 = sbr.rel (0) target = $region21
  $region20: #{forward_visual.11} parent=0 // pred_region
    _
  $region21: #{forward_visual.11} parent=0 // pred_fallthru
    _

</llo_original>
